<compile_context>
chip_gen: v6e
topology: v6e:2x2x1
jax: 0.10.0
libtpu: 0.0.40
codegen_flags: <defaults>
</compile_context>

<pallas_src>
import functools

import jax
import jax.numpy as jnp
from jax import lax
from jax.experimental import pallas as pl
from jax.experimental.pallas import tpu as pltpu


def _attention_kernel(x_ref, wq_ref, bq_ref, wkv_ref, bkv_ref, wout_ref, bout_ref,
                      o_ref, k_cache, v_cache, acc_ref, *,
                      dim_head, heads_per_group, q_tile, matmul_dtype, approx_recip):
    """One (batch, q_tile, head_group) grid step.

    x_ref    : (1, N, DIM)        full sequence for this batch element (resident)
    wq_ref   : (H, DIM, d)        per-head Wq^T, softmax scale folded in (resident)
    bq_ref   : (H, 1, d)   f32    per-head bq * scale
    wkv_ref  : (H, DIM, 2d)       per-head fused [Wk^T | Wv^T] (resident)
    bkv_ref  : (H, 1, 2d)  f32    per-head [bk | bv]
    wout_ref : (n_groups, G*d, DIM)  per-group slab of Wout^T (resident)
    bout_ref : (1, DIM)    f32    output bias
    o_ref    : (1, TQ, DIM)       output block (written on the last head group)
    k_cache  : (H, N, d)          VMEM K cache (filled at qi == 0, reused across q tiles)
    v_cache  : (H, N, d)          VMEM V cache
    acc_ref  : (TQ, DIM)   f32    output-projection accumulator
    """
    d = dim_head
    G = heads_per_group
    qi = pl.program_id(1)
    g = pl.program_id(2)

    @pl.when(g == 0)
    def _init_acc():
        # start the accumulator from the output bias
        acc_ref[...] = jnp.broadcast_to(bout_ref[...], acc_ref.shape).astype(jnp.float32)

    # --- K/V projection: once per batch element (qi == 0), cached across q tiles ---
    @pl.when(qi == 0)
    def _fill_kv():
        xkv = x_ref[0]                                             # (N, DIM), matmul_dtype
        for j in range(G):                                         # static, small unroll
            hh = g * G + j
            kv = jnp.dot(xkv, wkv_ref[hh],
                         preferred_element_type=jnp.float32) + bkv_ref[hh]   # (N, 2d) f32
            k_cache[hh] = kv[:, 0:d].astype(matmul_dtype)
            v_cache[hh] = kv[:, d:2 * d].astype(matmul_dtype)

    # --- q rows for this tile, sliced from the resident sequence block ---
    q_start = pl.multiple_of(qi * q_tile, q_tile)
    xq = x_ref[0, pl.ds(q_start, q_tile), :]                       # (TQ, DIM), matmul_dtype

    head_outs = []
    for j in range(G):
        hh = g * G + j
        # per-head Q projection (scale already folded into wq/bq)
        q = jnp.dot(xq, wq_ref[hh], preferred_element_type=jnp.float32) + bq_ref[hh]  # (TQ, d)
        k = k_cache[hh]                                            # (N, d) matmul_dtype
        # scores: contract the head dim of q with the head dim of k (no explicit .T)
        s = lax.dot_general(q.astype(matmul_dtype), k,
                            dimension_numbers=(((1,), (1,)), ((), ())),
                            preferred_element_type=jnp.float32)    # (TQ, N) f32
        # numerically-stable softmax in f32
        s = s - jnp.max(s, axis=-1, keepdims=True)
        p = jnp.exp(s)
        denom = jnp.sum(p, axis=-1, keepdims=True)
        if approx_recip:
            # EUP reciprocal: VALU-free, fine for the bf16 inference path
            p = p * pl.reciprocal(denom, approx=True)
        else:
            # exact division for the f32 validation path
            p = p / denom
        head_outs.append(jnp.dot(p.astype(matmul_dtype), v_cache[hh],
                                 preferred_element_type=jnp.float32))          # (TQ, d)

    # --- grouped output projection: one (TQ, G*d) @ (G*d, DIM) accumulate ---
    group_out = jnp.concatenate(head_outs, axis=-1).astype(matmul_dtype)       # (TQ, G*d)
    acc_ref[...] += jnp.dot(group_out, wout_ref[g], preferred_element_type=jnp.float32)

    @pl.when(g == pl.num_programs(2) - 1)
    def _finalize():
        # Dropout in to_out is identity at inference.
        o_ref[0] = acc_ref[...].astype(o_ref.dtype)


def attention_forward(x, w_qkv, b_qkv, w_out, b_out, *, n_heads, dim_head,
                      matmul_dtype=jnp.bfloat16, q_tile=None, head_group=None):
    """x: (B, N, DIM). Weights in PyTorch nn.Linear layout:
         w_qkv (3*inner, DIM), b_qkv (3*inner,), w_out (DIM, inner), b_out (DIM,).
    Returns (B, N, DIM)."""
    B, N, DIM = x.shape
    d = dim_head
    inner = n_heads * d
    assert w_qkv.shape == (3 * inner, DIM) and w_out.shape == (DIM, inner)
    scale = float(d) ** (-0.5)

    # ---- q tile: largest of {512, 256, 128} dividing N, else full N (small shapes) ----
    if q_tile is None:
        q_tile = N
        for t in (512, 256, 128):
            if N > t and N % t == 0:
                q_tile = t
                break
    assert N % q_tile == 0
    n_qt = N // q_tile

    # ---- head grouping: largest G dividing n_heads with G*d <= 256 (MXU width) ----
    if head_group is None:
        head_group = 1
        for gc in range(n_heads, 0, -1):
            if n_heads % gc == 0 and gc * d <= 256:
                head_group = gc
                break
    G = head_group
    assert n_heads % G == 0
    n_hg = n_heads // G

    # ---- re-pack weights once at XLA level (kernel gets clean, resident tiles) ----
    wq, wk, wv = jnp.split(w_qkv.astype(jnp.float32), 3, axis=0)   # each (inner, DIM)
    bq, bk, bv = jnp.split(b_qkv.astype(jnp.float32), 3, axis=0)   # each (inner,)
    wq = wq * scale                                                # fold softmax scale into Q
    bq = bq * scale

    def per_head_wT(w):     # (inner, DIM) -> (H, DIM, d)
        return w.reshape(n_heads, d, DIM).transpose(0, 2, 1)

    wq_packed = per_head_wT(wq).astype(matmul_dtype)                                # (H, DIM, d)
    wkv_packed = jnp.concatenate([per_head_wT(wk), per_head_wT(wv)],
                                 axis=-1).astype(matmul_dtype)                      # (H, DIM, 2d)
    bq_packed = bq.reshape(n_heads, 1, d)                                           # f32
    bkv_packed = jnp.concatenate([bk.reshape(n_heads, 1, d),
                                  bv.reshape(n_heads, 1, d)], axis=-1)              # f32 (H,1,2d)
    wout_packed = w_out.astype(jnp.float32).T.reshape(n_hg, G * d, DIM).astype(matmul_dtype)
    bout2 = b_out.astype(jnp.float32).reshape(1, DIM)

    x_in = x.astype(matmul_dtype)   # single x stream, already in matmul dtype

    # ---- VMEM budget estimate -> vmem_limit_bytes (feedback) ----
    itm = jnp.dtype(matmul_dtype).itemsize
    est = (2 * N * DIM * itm                                              # resident x block (dbl-buf)
           + (wq_packed.size + wkv_packed.size + wout_packed.size) * itm  # resident weights
           + (bq_packed.size + bkv_packed.size + DIM) * 4                 # biases (f32)
           + 2 * n_heads * N * d * itm                                    # K/V caches
           + q_tile * DIM * 4                                             # f32 accumulator
           + 2 * q_tile * DIM * jnp.dtype(x.dtype).itemsize               # output block (dbl-buf)
           + 4 * q_tile * N * 4)                                          # score/softmax temporaries
    vmem_limit = int(min(max(int(est * 1.3), 32 * 1024 * 1024), 128 * 1024 * 1024))

    kernel = functools.partial(
        _attention_kernel, dim_head=d, heads_per_group=G, q_tile=q_tile,
        matmul_dtype=matmul_dtype,
        approx_recip=(jnp.dtype(matmul_dtype) != jnp.dtype(jnp.float32)))

    return pl.pallas_call(
        kernel,
        out_shape=jax.ShapeDtypeStruct((B, N, DIM), x.dtype),
        grid_spec=pltpu.PrefetchScalarGridSpec(
            num_scalar_prefetch=0,
            grid=(B, n_qt, n_hg),
            in_specs=[
                # full sequence of x for this batch element (resident across qi & g)
                pl.BlockSpec((1, N, DIM), lambda b, qi, g: (b, 0, 0)),
                # resident weights/biases: constant index_map, head indexed in-kernel
                pl.BlockSpec((n_heads, DIM, d), lambda b, qi, g: (0, 0, 0)),
                pl.BlockSpec((n_heads, 1, d), lambda b, qi, g: (0, 0, 0)),
                pl.BlockSpec((n_heads, DIM, 2 * d), lambda b, qi, g: (0, 0, 0)),
                pl.BlockSpec((n_heads, 1, 2 * d), lambda b, qi, g: (0, 0, 0)),
                pl.BlockSpec((n_hg, G * d, DIM), lambda b, qi, g: (0, 0, 0)),
                pl.BlockSpec((1, DIM), lambda b, qi, g: (0, 0)),
            ],
            out_specs=pl.BlockSpec((1, q_tile, DIM), lambda b, qi, g: (b, qi, 0)),
            scratch_shapes=[
                pltpu.VMEM((n_heads, N, d), matmul_dtype),   # K cache
                pltpu.VMEM((n_heads, N, d), matmul_dtype),   # V cache
                pltpu.VMEM((q_tile, DIM), jnp.float32),      # out-proj accumulator
            ],
        ),
        compiler_params=pltpu.CompilerParams(
            # qi must be "arbitrary": the K/V caches filled at qi==0 are reused by
            # later q tiles of the same batch element (same-core scratch dependency).
            dimension_semantics=("parallel", "arbitrary", "arbitrary"),
            vmem_limit_bytes=vmem_limit),
    )(x_in, wq_packed, bq_packed, wkv_packed, bkv_packed, wout_packed, bout2)


def _reference(x, w_qkv, b_qkv, w_out, b_out, *, n_heads, dim_head):
    """Pure-JAX f32 reference mirroring the PyTorch forward."""
    B, N, DIM = x.shape
    inner = n_heads * dim_head
    scale = float(dim_head) ** (-0.5)
    qkv = jnp.einsum('bnd,od->bno', x, w_qkv) + b_qkv
    q, k, v = jnp.split(qkv, 3, axis=-1)

    def to_heads(t):   # b n (h d) -> b h n d
        return t.reshape(B, N, n_heads, dim_head).transpose(0, 2, 1, 3)

    Q, K, V = map(to_heads, (q, k, v))
    dots = jnp.einsum('bhnd,bhmd->bhnm', Q, K) * scale
    attn = jax.nn.softmax(dots, axis=-1)
    out = jnp.einsum('bhnm,bhmd->bhnd', attn, V)
    out = out.transpose(0, 2, 1, 3).reshape(B, N, inner)
    return jnp.einsum('bni,oi->bno', out, w_out) + b_out


if __name__ == "__main__":
    # Small, module-consistent shapes (X is b * n * dim).  No attention mask is
    # applied (matches the ViT Attention module being ported).
    B, N, DIM = 2, 8, 32
    N_HEADS, DIM_HEAD = 4, 8
    INNER = N_HEADS * DIM_HEAD   # 32
    DROPOUT = 0.1                # identity at inference

    key = jax.random.PRNGKey(0)
    kx, kw1, kb1, kw2, kb2 = jax.random.split(key, 5)

    x = jax.random.normal(kx, (B, N, DIM), dtype=jnp.float32)

    # nn.Linear layouts: to_qkv W (3*INNER, DIM), b (3*INNER,); to_out W (DIM, INNER), b (DIM,)
    w_qkv = jax.random.normal(kw1, (3 * INNER, DIM), dtype=jnp.float32) * 0.05
    b_qkv = jax.random.normal(kb1, (3 * INNER,), dtype=jnp.float32) * 0.05
    w_out = jax.random.normal(kw2, (DIM, INNER), dtype=jnp.float32) * 0.05
    b_out = jax.random.normal(kb2, (DIM,), dtype=jnp.float32) * 0.05

    y_ref = _reference(x, w_qkv, b_qkv, w_out, b_out,
                       n_heads=N_HEADS, dim_head=DIM_HEAD)

    # Exact-math path (f32 operands, exact softmax division): tight check.
    y_f32 = attention_forward(x, w_qkv, b_qkv, w_out, b_out,
                              n_heads=N_HEADS, dim_head=DIM_HEAD,
                              matmul_dtype=jnp.float32)
    y_f32 = jax.block_until_ready(y_f32)
    assert y_f32.shape == (B, N, DIM)
    assert jnp.allclose(y_f32, y_ref, atol=2e-4, rtol=2e-4)

    # MXU-optimized path (bf16 operands, f32 accumulation, approx reciprocal): relaxed check.
    y_bf16 = attention_forward(x, w_qkv, b_qkv, w_out, b_out,
                               n_heads=N_HEADS, dim_head=DIM_HEAD,
                               matmul_dtype=jnp.bfloat16)
    y_bf16 = jax.block_until_ready(y_bf16)
    assert y_bf16.shape == (B, N, DIM)
    assert jnp.allclose(y_bf16, y_ref, atol=2e-2, rtol=2e-2)

    print("KERNEL_OK")
</pallas_src>

<mosaic_0001>
module attributes {stable_mosaic.version = 11 : i64} {
  func.func @_attention_kernel(%arg0: i32, %arg1: i32, %arg2: i32, %arg3: memref<1x8x32xf32, #tpu.memory_space<vmem>>, %arg4: memref<4x32x8xf32, #tpu.memory_space<vmem>>, %arg5: memref<4x1x8xf32, #tpu.memory_space<vmem>>, %arg6: memref<4x32x16xf32, #tpu.memory_space<vmem>>, %arg7: memref<4x1x16xf32, #tpu.memory_space<vmem>>, %arg8: memref<1x32x32xf32, #tpu.memory_space<vmem>>, %arg9: memref<1x32xf32, #tpu.memory_space<vmem>>, %arg10: memref<1x8x32xf32, #tpu.memory_space<vmem>>, %arg11: memref<4x8x8xf32, #tpu.memory_space<vmem>>, %arg12: memref<4x8x8xf32, #tpu.memory_space<vmem>>, %arg13: memref<8x32xf32, #tpu.memory_space<vmem>>) attributes {dimension_semantics = [#tpu.dimension_semantics<parallel>, #tpu.dimension_semantics<arbitrary>, #tpu.dimension_semantics<arbitrary>], iteration_bounds = array<i64: 2, 1, 1>, scalar_prefetch = 0 : i64, scratch_operands = 3 : i64, tpu.core_type = #tpu.core_type<tc>, window_params = [{transform_indices = @transform_0, window_bounds = array<i64: 1, 8, 32>}, {pipeline_mode = #tpu.pipeline_mode<synchronous>, transform_indices = @transform_1, window_bounds = array<i64: 4, 32, 8>}, {pipeline_mode = #tpu.pipeline_mode<synchronous>, transform_indices = @transform_2, window_bounds = array<i64: 4, 1, 8>}, {pipeline_mode = #tpu.pipeline_mode<synchronous>, transform_indices = @transform_3, window_bounds = array<i64: 4, 32, 16>}, {pipeline_mode = #tpu.pipeline_mode<synchronous>, transform_indices = @transform_4, window_bounds = array<i64: 4, 1, 16>}, {pipeline_mode = #tpu.pipeline_mode<synchronous>, transform_indices = @transform_5, window_bounds = array<i64: 1, 32, 32>}, {pipeline_mode = #tpu.pipeline_mode<synchronous>, transform_indices = @transform_6, window_bounds = array<i64: 1, 32>}, {transform_indices = @transform_7, window_bounds = array<i64: 1, 8, 32>}]} {
    %c0_i32 = arith.constant 0 : i32
    %0 = arith.cmpi eq, %arg2, %c0_i32 : i32
    %1 = arith.extui %0 : i1 to i32
    %c0_i32_0 = arith.constant 0 : i32
    %2 = arith.cmpi ne, %1, %c0_i32_0 : i32
    scf.if %2 {
      %c0_68 = arith.constant 0 : index
      %c0_69 = arith.constant 0 : index
      %134 = vector.load %arg9[%c0_68, %c0_69] : memref<1x32xf32, #tpu.memory_space<vmem>>, vector<1x32xf32>
      %135 = vector.shape_cast %134 : vector<1x32xf32> to vector<1x32xf32>
      %136 = vector.broadcast %135 : vector<1x32xf32> to vector<8x32xf32>
      %c0_70 = arith.constant 0 : index
      %c0_71 = arith.constant 0 : index
      %137 = vector.load %arg13[%c0_70, %c0_71] : memref<8x32xf32, #tpu.memory_space<vmem>>, vector<8x32xf32>
      tpu.vector_store %arg13[%c0_70, %c0_71], %136 {strides = array<i32>} : memref<8x32xf32, #tpu.memory_space<vmem>>, vector<8x32xf32>,
    } else {
    }
    %c0_i32_1 = arith.constant 0 : i32
    %3 = arith.cmpi eq, %arg1, %c0_i32_1 : i32
    %4 = arith.extui %3 : i1 to i32
    %c0_i32_2 = arith.constant 0 : i32
    %5 = arith.cmpi ne, %4, %c0_i32_2 : i32
    scf.if %5 {
      %c0_68 = arith.constant 0 : index
      %c0_69 = arith.constant 0 : index
      %c0_70 = arith.constant 0 : index
      %134 = vector.load %arg3[%c0_68, %c0_69, %c0_70] : memref<1x8x32xf32, #tpu.memory_space<vmem>>, vector<1x8x32xf32>
      %135 = vector.shape_cast %134 : vector<1x8x32xf32> to vector<8x32xf32>
      %c4_i32_71 = arith.constant 4 : i32
      %136 = arith.muli %arg2, %c4_i32_71 : i32
      %c0_i32_72 = arith.constant 0 : i32
      %137 = arith.addi %136, %c0_i32_72 : i32
      %138 = arith.index_cast %137 : i32 to index
      %c0_73 = arith.constant 0 : index
      %c0_74 = arith.constant 0 : index
      %139 = vector.load %arg6[%138, %c0_73, %c0_74] : memref<4x32x16xf32, #tpu.memory_space<vmem>>, vector<1x32x16xf32>
      %140 = vector.shape_cast %139 : vector<1x32x16xf32> to vector<32x16xf32>
      %cst_75 = arith.constant dense<0.000000e+00> : vector<8x16xf32>
      %141 = tpu.matmul %135, %140, %cst_75 {dimension_numbers = #tpu.dot_dimension_numbers<[1], [0], [0], [1], [0, 0, 1, 1], [], []>} : vector<8x32xf32>, vector<32x16xf32>, vector<8x16xf32> -> vector<8x16xf32>
      %142 = arith.index_cast %137 : i32 to index
      %c0_76 = arith.constant 0 : index
      %c0_77 = arith.constant 0 : index
      %143 = vector.load %arg7[%142, %c0_76, %c0_77] : memref<4x1x16xf32, #tpu.memory_space<vmem>>, vector<1x1x16xf32>
      %144 = vector.shape_cast %143 : vector<1x1x16xf32> to vector<1x16xf32>
      %145 = vector.broadcast %144 : vector<1x16xf32> to vector<8x16xf32>
      %146 = arith.addf %141, %145 : vector<8x16xf32>
      %147 = vector.extract_strided_slice %146 {offsets = [0, 0], sizes = [8, 8], strides = [1, 1]} : vector<8x16xf32> to vector<8x8xf32>
      %148 = arith.index_cast %137 : i32 to index
      %c0_78 = arith.constant 0 : index
      %c0_79 = arith.constant 0 : index
      %149 = vector.load %arg11[%148, %c0_78, %c0_79] : memref<4x8x8xf32, #tpu.memory_space<vmem>>, vector<1x8x8xf32>
      %150 = vector.shape_cast %149 : vector<1x8x8xf32> to vector<8x8xf32>
      %151 = vector.shape_cast %147 : vector<8x8xf32> to vector<1x8x8xf32>
      tpu.vector_store %arg11[%148, %c0_78, %c0_79], %151 {strides = array<i32>} : memref<4x8x8xf32, #tpu.memory_space<vmem>>, vector<1x8x8xf32>,
      %152 = vector.extract_strided_slice %146 {offsets = [0, 8], sizes = [8, 8], strides = [1, 1]} : vector<8x16xf32> to vector<8x8xf32>
      %153 = arith.index_cast %137 : i32 to index
      %c0_80 = arith.constant 0 : index
      %c0_81 = arith.constant 0 : index
      %154 = vector.load %arg12[%153, %c0_80, %c0_81] : memref<4x8x8xf32, #tpu.memory_space<vmem>>, vector<1x8x8xf32>
      %155 = vector.shape_cast %154 : vector<1x8x8xf32> to vector<8x8xf32>
      %156 = vector.shape_cast %152 : vector<8x8xf32> to vector<1x8x8xf32>
      tpu.vector_store %arg12[%153, %c0_80, %c0_81], %156 {strides = array<i32>} : memref<4x8x8xf32, #tpu.memory_space<vmem>>, vector<1x8x8xf32>,
      %c4_i32_82 = arith.constant 4 : i32
      %157 = arith.muli %arg2, %c4_i32_82 : i32
      %c1_i32_83 = arith.constant 1 : i32
      %158 = arith.addi %157, %c1_i32_83 : i32
      %159 = arith.index_cast %158 : i32 to index
      %c0_84 = arith.constant 0 : index
      %c0_85 = arith.constant 0 : index
      %160 = vector.load %arg6[%159, %c0_84, %c0_85] : memref<4x32x16xf32, #tpu.memory_space<vmem>>, vector<1x32x16xf32>
      %161 = vector.shape_cast %160 : vector<1x32x16xf32> to vector<32x16xf32>
      %cst_86 = arith.constant dense<0.000000e+00> : vector<8x16xf32>
      %162 = tpu.matmul %135, %161, %cst_86 {dimension_numbers = #tpu.dot_dimension_numbers<[1], [0], [0], [1], [0, 0, 1, 1], [], []>} : vector<8x32xf32>, vector<32x16xf32>, vector<8x16xf32> -> vector<8x16xf32>
      %163 = arith.index_cast %158 : i32 to index
      %c0_87 = arith.constant 0 : index
      %c0_88 = arith.constant 0 : index
      %164 = vector.load %arg7[%163, %c0_87, %c0_88] : memref<4x1x16xf32, #tpu.memory_space<vmem>>, vector<1x1x16xf32>
      %165 = vector.shape_cast %164 : vector<1x1x16xf32> to vector<1x16xf32>
      %166 = vector.broadcast %165 : vector<1x16xf32> to vector<8x16xf32>
      %167 = arith.addf %162, %166 : vector<8x16xf32>
      %168 = vector.extract_strided_slice %167 {offsets = [0, 0], sizes = [8, 8], strides = [1, 1]} : vector<8x16xf32> to vector<8x8xf32>
      %169 = arith.index_cast %158 : i32 to index
      %c0_89 = arith.constant 0 : index
      %c0_90 = arith.constant 0 : index
      %170 = vector.load %arg11[%169, %c0_89, %c0_90] : memref<4x8x8xf32, #tpu.memory_space<vmem>>, vector<1x8x8xf32>
      %171 = vector.shape_cast %170 : vector<1x8x8xf32> to vector<8x8xf32>
      %172 = vector.shape_cast %168 : vector<8x8xf32> to vector<1x8x8xf32>
      tpu.vector_store %arg11[%169, %c0_89, %c0_90], %172 {strides = array<i32>} : memref<4x8x8xf32, #tpu.memory_space<vmem>>, vector<1x8x8xf32>,
      %173 = vector.extract_strided_slice %167 {offsets = [0, 8], sizes = [8, 8], strides = [1, 1]} : vector<8x16xf32> to vector<8x8xf32>
      %174 = arith.index_cast %158 : i32 to index
      %c0_91 = arith.constant 0 : index
      %c0_92 = arith.constant 0 : index
      %175 = vector.load %arg12[%174, %c0_91, %c0_92] : memref<4x8x8xf32, #tpu.memory_space<vmem>>, vector<1x8x8xf32>
      %176 = vector.shape_cast %175 : vector<1x8x8xf32> to vector<8x8xf32>
      %177 = vector.shape_cast %173 : vector<8x8xf32> to vector<1x8x8xf32>
      tpu.vector_store %arg12[%174, %c0_91, %c0_92], %177 {strides = array<i32>} : memref<4x8x8xf32, #tpu.memory_space<vmem>>, vector<1x8x8xf32>,
      %c4_i32_93 = arith.constant 4 : i32
      %178 = arith.muli %arg2, %c4_i32_93 : i32
      %c2_i32_94 = arith.constant 2 : i32
      %179 = arith.addi %178, %c2_i32_94 : i32
      %180 = arith.index_cast %179 : i32 to index
      %c0_95 = arith.constant 0 : index
      %c0_96 = arith.constant 0 : index
      %181 = vector.load %arg6[%180, %c0_95, %c0_96] : memref<4x32x16xf32, #tpu.memory_space<vmem>>, vector<1x32x16xf32>
      %182 = vector.shape_cast %181 : vector<1x32x16xf32> to vector<32x16xf32>
      %cst_97 = arith.constant dense<0.000000e+00> : vector<8x16xf32>
      %183 = tpu.matmul %135, %182, %cst_97 {dimension_numbers = #tpu.dot_dimension_numbers<[1], [0], [0], [1], [0, 0, 1, 1], [], []>} : vector<8x32xf32>, vector<32x16xf32>, vector<8x16xf32> -> vector<8x16xf32>
      %184 = arith.index_cast %179 : i32 to index
      %c0_98 = arith.constant 0 : index
      %c0_99 = arith.constant 0 : index
      %185 = vector.load %arg7[%184, %c0_98, %c0_99] : memref<4x1x16xf32, #tpu.memory_space<vmem>>, vector<1x1x16xf32>
      %186 = vector.shape_cast %185 : vector<1x1x16xf32> to vector<1x16xf32>
      %187 = vector.broadcast %186 : vector<1x16xf32> to vector<8x16xf32>
      %188 = arith.addf %183, %187 : vector<8x16xf32>
      %189 = vector.extract_strided_slice %188 {offsets = [0, 0], sizes = [8, 8], strides = [1, 1]} : vector<8x16xf32> to vector<8x8xf32>
      %190 = arith.index_cast %179 : i32 to index
      %c0_100 = arith.constant 0 : index
      %c0_101 = arith.constant 0 : index
      %191 = vector.load %arg11[%190, %c0_100, %c0_101] : memref<4x8x8xf32, #tpu.memory_space<vmem>>, vector<1x8x8xf32>
      %192 = vector.shape_cast %191 : vector<1x8x8xf32> to vector<8x8xf32>
      %193 = vector.shape_cast %189 : vector<8x8xf32> to vector<1x8x8xf32>
      tpu.vector_store %arg11[%190, %c0_100, %c0_101], %193 {strides = array<i32>} : memref<4x8x8xf32, #tpu.memory_space<vmem>>, vector<1x8x8xf32>,
      %194 = vector.extract_strided_slice %188 {offsets = [0, 8], sizes = [8, 8], strides = [1, 1]} : vector<8x16xf32> to vector<8x8xf32>
      %195 = arith.index_cast %179 : i32 to index
      %c0_102 = arith.constant 0 : index
      %c0_103 = arith.constant 0 : index
      %196 = vector.load %arg12[%195, %c0_102, %c0_103] : memref<4x8x8xf32, #tpu.memory_space<vmem>>, vector<1x8x8xf32>
      %197 = vector.shape_cast %196 : vector<1x8x8xf32> to vector<8x8xf32>
      %198 = vector.shape_cast %194 : vector<8x8xf32> to vector<1x8x8xf32>
      tpu.vector_store %arg12[%195, %c0_102, %c0_103], %198 {strides = array<i32>} : memref<4x8x8xf32, #tpu.memory_space<vmem>>, vector<1x8x8xf32>,
      %c4_i32_104 = arith.constant 4 : i32
      %199 = arith.muli %arg2, %c4_i32_104 : i32
      %c3_i32_105 = arith.constant 3 : i32
      %200 = arith.addi %199, %c3_i32_105 : i32
      %201 = arith.index_cast %200 : i32 to index
      %c0_106 = arith.constant 0 : index
      %c0_107 = arith.constant 0 : index
      %202 = vector.load %arg6[%201, %c0_106, %c0_107] : memref<4x32x16xf32, #tpu.memory_space<vmem>>, vector<1x32x16xf32>
      %203 = vector.shape_cast %202 : vector<1x32x16xf32> to vector<32x16xf32>
      %cst_108 = arith.constant dense<0.000000e+00> : vector<8x16xf32>
      %204 = tpu.matmul %135, %203, %cst_108 {dimension_numbers = #tpu.dot_dimension_numbers<[1], [0], [0], [1], [0, 0, 1, 1], [], []>} : vector<8x32xf32>, vector<32x16xf32>, vector<8x16xf32> -> vector<8x16xf32>
      %205 = arith.index_cast %200 : i32 to index
      %c0_109 = arith.constant 0 : index
      %c0_110 = arith.constant 0 : index
      %206 = vector.load %arg7[%205, %c0_109, %c0_110] : memref<4x1x16xf32, #tpu.memory_space<vmem>>, vector<1x1x16xf32>
      %207 = vector.shape_cast %206 : vector<1x1x16xf32> to vector<1x16xf32>
      %208 = vector.broadcast %207 : vector<1x16xf32> to vector<8x16xf32>
      %209 = arith.addf %204, %208 : vector<8x16xf32>
      %210 = vector.extract_strided_slice %209 {offsets = [0, 0], sizes = [8, 8], strides = [1, 1]} : vector<8x16xf32> to vector<8x8xf32>
      %211 = arith.index_cast %200 : i32 to index
      %c0_111 = arith.constant 0 : index
      %c0_112 = arith.constant 0 : index
      %212 = vector.load %arg11[%211, %c0_111, %c0_112] : memref<4x8x8xf32, #tpu.memory_space<vmem>>, vector<1x8x8xf32>
      %213 = vector.shape_cast %212 : vector<1x8x8xf32> to vector<8x8xf32>
      %214 = vector.shape_cast %210 : vector<8x8xf32> to vector<1x8x8xf32>
      tpu.vector_store %arg11[%211, %c0_111, %c0_112], %214 {strides = array<i32>} : memref<4x8x8xf32, #tpu.memory_space<vmem>>, vector<1x8x8xf32>,
      %215 = vector.extract_strided_slice %209 {offsets = [0, 8], sizes = [8, 8], strides = [1, 1]} : vector<8x16xf32> to vector<8x8xf32>
      %216 = arith.index_cast %200 : i32 to index
      %c0_113 = arith.constant 0 : index
      %c0_114 = arith.constant 0 : index
      %217 = vector.load %arg12[%216, %c0_113, %c0_114] : memref<4x8x8xf32, #tpu.memory_space<vmem>>, vector<1x8x8xf32>
      %218 = vector.shape_cast %217 : vector<1x8x8xf32> to vector<8x8xf32>
      %219 = vector.shape_cast %215 : vector<8x8xf32> to vector<1x8x8xf32>
      tpu.vector_store %arg12[%216, %c0_113, %c0_114], %219 {strides = array<i32>} : memref<4x8x8xf32, #tpu.memory_space<vmem>>, vector<1x8x8xf32>,
    } else {
    }
    %c8_i32 = arith.constant 8 : i32
    %6 = arith.muli %arg1, %c8_i32 : i32
    %7 = tpu.assume_multiple %6, 8 : i32
    %c0 = arith.constant 0 : index
    %8 = arith.index_cast %7 : i32 to index
    %c0_3 = arith.constant 0 : index
    %9 = vector.load %arg3[%c0, %8, %c0_3] : memref<1x8x32xf32, #tpu.memory_space<vmem>>, vector<1x8x32xf32>
    %10 = vector.shape_cast %9 : vector<1x8x32xf32> to vector<8x32xf32>
    %c4_i32 = arith.constant 4 : i32
    %11 = arith.muli %arg2, %c4_i32 : i32
    %c0_i32_4 = arith.constant 0 : i32
    %12 = arith.addi %11, %c0_i32_4 : i32
    %13 = arith.index_cast %12 : i32 to index
    %c0_5 = arith.constant 0 : index
    %c0_6 = arith.constant 0 : index
    %14 = vector.load %arg4[%13, %c0_5, %c0_6] : memref<4x32x8xf32, #tpu.memory_space<vmem>>, vector<1x32x8xf32>
    %15 = vector.shape_cast %14 : vector<1x32x8xf32> to vector<32x8xf32>
    %cst = arith.constant dense<0.000000e+00> : vector<8x8xf32>
    %16 = tpu.matmul %10, %15, %cst {dimension_numbers = #tpu.dot_dimension_numbers<[1], [0], [0], [1], [0, 0, 1, 1], [], []>} : vector<8x32xf32>, vector<32x8xf32>, vector<8x8xf32> -> vector<8x8xf32>
    %17 = arith.index_cast %12 : i32 to index
    %c0_7 = arith.constant 0 : index
    %c0_8 = arith.constant 0 : index
    %18 = vector.load %arg5[%17, %c0_7, %c0_8] : memref<4x1x8xf32, #tpu.memory_space<vmem>>, vector<1x1x8xf32>
    %19 = vector.shape_cast %18 : vector<1x1x8xf32> to vector<1x8xf32>
    %20 = vector.broadcast %19 : vector<1x8xf32> to vector<8x8xf32>
    %21 = arith.addf %16, %20 : vector<8x8xf32>
    %22 = arith.index_cast %12 : i32 to index
    %c0_9 = arith.constant 0 : index
    %c0_10 = arith.constant 0 : index
    %23 = vector.load %arg11[%22, %c0_9, %c0_10] : memref<4x8x8xf32, #tpu.memory_space<vmem>>, vector<1x8x8xf32>
    %24 = vector.shape_cast %23 : vector<1x8x8xf32> to vector<8x8xf32>
    %cst_11 = arith.constant dense<0.000000e+00> : vector<8x8xf32>
    %25 = tpu.matmul %21, %24, %cst_11 {dimension_numbers = #tpu.dot_dimension_numbers<[1], [1], [0], [0], [0, 0, 1, 0], [], []>} : vector<8x8xf32>, vector<8x8xf32>, vector<8x8xf32> -> vector<8x8xf32>
    %cst_12 = arith.constant dense<0xFF800000> : vector<8xf32>
    %26 = vector.multi_reduction <maximumf>, %25, %cst_12 [1] : vector<8x8xf32> to vector<8xf32>
    %27 = vector.shape_cast %26 : vector<8xf32> to vector<8x1xf32>
    %28 = vector.broadcast %27 : vector<8x1xf32> to vector<8x8xf32>
    %29 = arith.subf %25, %28 : vector<8x8xf32>
    %30 = math.exp %29 : vector<8x8xf32>
    %cst_13 = arith.constant dense<0.000000e+00> : vector<8xf32>
    %31 = vector.multi_reduction <add>, %30, %cst_13 [1] : vector<8x8xf32> to vector<8xf32>
    %32 = vector.shape_cast %31 : vector<8xf32> to vector<8x1xf32>
    %33 = vector.broadcast %32 : vector<8x1xf32> to vector<8x8xf32>
    %34 = arith.divf %30, %33 : vector<8x8xf32>
    %35 = arith.index_cast %12 : i32 to index
    %c0_14 = arith.constant 0 : index
    %c0_15 = arith.constant 0 : index
    %36 = vector.load %arg12[%35, %c0_14, %c0_15] : memref<4x8x8xf32, #tpu.memory_space<vmem>>, vector<1x8x8xf32>
    %37 = vector.shape_cast %36 : vector<1x8x8xf32> to vector<8x8xf32>
    %cst_16 = arith.constant dense<0.000000e+00> : vector<8x8xf32>
    %38 = tpu.matmul %34, %37, %cst_16 {dimension_numbers = #tpu.dot_dimension_numbers<[1], [0], [0], [1], [0, 0, 1, 1], [], []>} : vector<8x8xf32>, vector<8x8xf32>, vector<8x8xf32> -> vector<8x8xf32>
    %c4_i32_17 = arith.constant 4 : i32
    %39 = arith.muli %arg2, %c4_i32_17 : i32
    %c1_i32 = arith.constant 1 : i32
    %40 = arith.addi %39, %c1_i32 : i32
    %41 = arith.index_cast %40 : i32 to index
    %c0_18 = arith.constant 0 : index
    %c0_19 = arith.constant 0 : index
    %42 = vector.load %arg4[%41, %c0_18, %c0_19] : memref<4x32x8xf32, #tpu.memory_space<vmem>>, vector<1x32x8xf32>
    %43 = vector.shape_cast %42 : vector<1x32x8xf32> to vector<32x8xf32>
    %cst_20 = arith.constant dense<0.000000e+00> : vector<8x8xf32>
    %44 = tpu.matmul %10, %43, %cst_20 {dimension_numbers = #tpu.dot_dimension_numbers<[1], [0], [0], [1], [0, 0, 1, 1], [], []>} : vector<8x32xf32>, vector<32x8xf32>, vector<8x8xf32> -> vector<8x8xf32>
    %45 = arith.index_cast %40 : i32 to index
    %c0_21 = arith.constant 0 : index
    %c0_22 = arith.constant 0 : index
    %46 = vector.load %arg5[%45, %c0_21, %c0_22] : memref<4x1x8xf32, #tpu.memory_space<vmem>>, vector<1x1x8xf32>
    %47 = vector.shape_cast %46 : vector<1x1x8xf32> to vector<1x8xf32>
    %48 = vector.broadcast %47 : vector<1x8xf32> to vector<8x8xf32>
    %49 = arith.addf %44, %48 : vector<8x8xf32>
    %50 = arith.index_cast %40 : i32 to index
    %c0_23 = arith.constant 0 : index
    %c0_24 = arith.constant 0 : index
    %51 = vector.load %arg11[%50, %c0_23, %c0_24] : memref<4x8x8xf32, #tpu.memory_space<vmem>>, vector<1x8x8xf32>
    %52 = vector.shape_cast %51 : vector<1x8x8xf32> to vector<8x8xf32>
    %cst_25 = arith.constant dense<0.000000e+00> : vector<8x8xf32>
    %53 = tpu.matmul %49, %52, %cst_25 {dimension_numbers = #tpu.dot_dimension_numbers<[1], [1], [0], [0], [0, 0, 1, 0], [], []>} : vector<8x8xf32>, vector<8x8xf32>, vector<8x8xf32> -> vector<8x8xf32>
    %cst_26 = arith.constant dense<0xFF800000> : vector<8xf32>
    %54 = vector.multi_reduction <maximumf>, %53, %cst_26 [1] : vector<8x8xf32> to vector<8xf32>
    %55 = vector.shape_cast %54 : vector<8xf32> to vector<8x1xf32>
    %56 = vector.broadcast %55 : vector<8x1xf32> to vector<8x8xf32>
    %57 = arith.subf %53, %56 : vector<8x8xf32>
    %58 = math.exp %57 : vector<8x8xf32>
    %cst_27 = arith.constant dense<0.000000e+00> : vector<8xf32>
    %59 = vector.multi_reduction <add>, %58, %cst_27 [1] : vector<8x8xf32> to vector<8xf32>
    %60 = vector.shape_cast %59 : vector<8xf32> to vector<8x1xf32>
    %61 = vector.broadcast %60 : vector<8x1xf32> to vector<8x8xf32>
    %62 = arith.divf %58, %61 : vector<8x8xf32>
    %63 = arith.index_cast %40 : i32 to index
    %c0_28 = arith.constant 0 : index
    %c0_29 = arith.constant 0 : index
    %64 = vector.load %arg12[%63, %c0_28, %c0_29] : memref<4x8x8xf32, #tpu.memory_space<vmem>>, vector<1x8x8xf32>
    %65 = vector.shape_cast %64 : vector<1x8x8xf32> to vector<8x8xf32>
    %cst_30 = arith.constant dense<0.000000e+00> : vector<8x8xf32>
    %66 = tpu.matmul %62, %65, %cst_30 {dimension_numbers = #tpu.dot_dimension_numbers<[1], [0], [0], [1], [0, 0, 1, 1], [], []>} : vector<8x8xf32>, vector<8x8xf32>, vector<8x8xf32> -> vector<8x8xf32>
    %c4_i32_31 = arith.constant 4 : i32
    %67 = arith.muli %arg2, %c4_i32_31 : i32
    %c2_i32 = arith.constant 2 : i32
    %68 = arith.addi %67, %c2_i32 : i32
    %69 = arith.index_cast %68 : i32 to index
    %c0_32 = arith.constant 0 : index
    %c0_33 = arith.constant 0 : index
    %70 = vector.load %arg4[%69, %c0_32, %c0_33] : memref<4x32x8xf32, #tpu.memory_space<vmem>>, vector<1x32x8xf32>
    %71 = vector.shape_cast %70 : vector<1x32x8xf32> to vector<32x8xf32>
    %cst_34 = arith.constant dense<0.000000e+00> : vector<8x8xf32>
    %72 = tpu.matmul %10, %71, %cst_34 {dimension_numbers = #tpu.dot_dimension_numbers<[1], [0], [0], [1], [0, 0, 1, 1], [], []>} : vector<8x32xf32>, vector<32x8xf32>, vector<8x8xf32> -> vector<8x8xf32>
    %73 = arith.index_cast %68 : i32 to index
    %c0_35 = arith.constant 0 : index
    %c0_36 = arith.constant 0 : index
    %74 = vector.load %arg5[%73, %c0_35, %c0_36] : memref<4x1x8xf32, #tpu.memory_space<vmem>>, vector<1x1x8xf32>
    %75 = vector.shape_cast %74 : vector<1x1x8xf32> to vector<1x8xf32>
    %76 = vector.broadcast %75 : vector<1x8xf32> to vector<8x8xf32>
    %77 = arith.addf %72, %76 : vector<8x8xf32>
    %78 = arith.index_cast %68 : i32 to index
    %c0_37 = arith.constant 0 : index
    %c0_38 = arith.constant 0 : index
    %79 = vector.load %arg11[%78, %c0_37, %c0_38] : memref<4x8x8xf32, #tpu.memory_space<vmem>>, vector<1x8x8xf32>
    %80 = vector.shape_cast %79 : vector<1x8x8xf32> to vector<8x8xf32>
    %cst_39 = arith.constant dense<0.000000e+00> : vector<8x8xf32>
    %81 = tpu.matmul %77, %80, %cst_39 {dimension_numbers = #tpu.dot_dimension_numbers<[1], [1], [0], [0], [0, 0, 1, 0], [], []>} : vector<8x8xf32>, vector<8x8xf32>, vector<8x8xf32> -> vector<8x8xf32>
    %cst_40 = arith.constant dense<0xFF800000> : vector<8xf32>
    %82 = vector.multi_reduction <maximumf>, %81, %cst_40 [1] : vector<8x8xf32> to vector<8xf32>
    %83 = vector.shape_cast %82 : vector<8xf32> to vector<8x1xf32>
    %84 = vector.broadcast %83 : vector<8x1xf32> to vector<8x8xf32>
    %85 = arith.subf %81, %84 : vector<8x8xf32>
    %86 = math.exp %85 : vector<8x8xf32>
    %cst_41 = arith.constant dense<0.000000e+00> : vector<8xf32>
    %87 = vector.multi_reduction <add>, %86, %cst_41 [1] : vector<8x8xf32> to vector<8xf32>
    %88 = vector.shape_cast %87 : vector<8xf32> to vector<8x1xf32>
    %89 = vector.broadcast %88 : vector<8x1xf32> to vector<8x8xf32>
    %90 = arith.divf %86, %89 : vector<8x8xf32>
    %91 = arith.index_cast %68 : i32 to index
    %c0_42 = arith.constant 0 : index
    %c0_43 = arith.constant 0 : index
    %92 = vector.load %arg12[%91, %c0_42, %c0_43] : memref<4x8x8xf32, #tpu.memory_space<vmem>>, vector<1x8x8xf32>
    %93 = vector.shape_cast %92 : vector<1x8x8xf32> to vector<8x8xf32>
    %cst_44 = arith.constant dense<0.000000e+00> : vector<8x8xf32>
    %94 = tpu.matmul %90, %93, %cst_44 {dimension_numbers = #tpu.dot_dimension_numbers<[1], [0], [0], [1], [0, 0, 1, 1], [], []>} : vector<8x8xf32>, vector<8x8xf32>, vector<8x8xf32> -> vector<8x8xf32>
    %c4_i32_45 = arith.constant 4 : i32
    %95 = arith.muli %arg2, %c4_i32_45 : i32
    %c3_i32 = arith.constant 3 : i32
    %96 = arith.addi %95, %c3_i32 : i32
    %97 = arith.index_cast %96 : i32 to index
    %c0_46 = arith.constant 0 : index
    %c0_47 = arith.constant 0 : index
    %98 = vector.load %arg4[%97, %c0_46, %c0_47] : memref<4x32x8xf32, #tpu.memory_space<vmem>>, vector<1x32x8xf32>
    %99 = vector.shape_cast %98 : vector<1x32x8xf32> to vector<32x8xf32>
    %cst_48 = arith.constant dense<0.000000e+00> : vector<8x8xf32>
    %100 = tpu.matmul %10, %99, %cst_48 {dimension_numbers = #tpu.dot_dimension_numbers<[1], [0], [0], [1], [0, 0, 1, 1], [], []>} : vector<8x32xf32>, vector<32x8xf32>, vector<8x8xf32> -> vector<8x8xf32>
    %101 = arith.index_cast %96 : i32 to index
    %c0_49 = arith.constant 0 : index
    %c0_50 = arith.constant 0 : index
    %102 = vector.load %arg5[%101, %c0_49, %c0_50] : memref<4x1x8xf32, #tpu.memory_space<vmem>>, vector<1x1x8xf32>
    %103 = vector.shape_cast %102 : vector<1x1x8xf32> to vector<1x8xf32>
    %104 = vector.broadcast %103 : vector<1x8xf32> to vector<8x8xf32>
    %105 = arith.addf %100, %104 : vector<8x8xf32>
    %106 = arith.index_cast %96 : i32 to index
    %c0_51 = arith.constant 0 : index
    %c0_52 = arith.constant 0 : index
    %107 = vector.load %arg11[%106, %c0_51, %c0_52] : memref<4x8x8xf32, #tpu.memory_space<vmem>>, vector<1x8x8xf32>
    %108 = vector.shape_cast %107 : vector<1x8x8xf32> to vector<8x8xf32>
    %cst_53 = arith.constant dense<0.000000e+00> : vector<8x8xf32>
    %109 = tpu.matmul %105, %108, %cst_53 {dimension_numbers = #tpu.dot_dimension_numbers<[1], [1], [0], [0], [0, 0, 1, 0], [], []>} : vector<8x8xf32>, vector<8x8xf32>, vector<8x8xf32> -> vector<8x8xf32>
    %cst_54 = arith.constant dense<0xFF800000> : vector<8xf32>
    %110 = vector.multi_reduction <maximumf>, %109, %cst_54 [1] : vector<8x8xf32> to vector<8xf32>
    %111 = vector.shape_cast %110 : vector<8xf32> to vector<8x1xf32>
    %112 = vector.broadcast %111 : vector<8x1xf32> to vector<8x8xf32>
    %113 = arith.subf %109, %112 : vector<8x8xf32>
    %114 = math.exp %113 : vector<8x8xf32>
    %cst_55 = arith.constant dense<0.000000e+00> : vector<8xf32>
    %115 = vector.multi_reduction <add>, %114, %cst_55 [1] : vector<8x8xf32> to vector<8xf32>
    %116 = vector.shape_cast %115 : vector<8xf32> to vector<8x1xf32>
    %117 = vector.broadcast %116 : vector<8x1xf32> to vector<8x8xf32>
    %118 = arith.divf %114, %117 : vector<8x8xf32>
    %119 = arith.index_cast %96 : i32 to index
    %c0_56 = arith.constant 0 : index
    %c0_57 = arith.constant 0 : index
    %120 = vector.load %arg12[%119, %c0_56, %c0_57] : memref<4x8x8xf32, #tpu.memory_space<vmem>>, vector<1x8x8xf32>
    %121 = vector.shape_cast %120 : vector<1x8x8xf32> to vector<8x8xf32>
    %cst_58 = arith.constant dense<0.000000e+00> : vector<8x8xf32>
    %122 = tpu.matmul %118, %121, %cst_58 {dimension_numbers = #tpu.dot_dimension_numbers<[1], [0], [0], [1], [0, 0, 1, 1], [], []>} : vector<8x8xf32>, vector<8x8xf32>, vector<8x8xf32> -> vector<8x8xf32>
    %123 = tpu.concatenate %38, %66, %94, %122 in 1 : vector<8x8xf32>, vector<8x8xf32>, vector<8x8xf32>, vector<8x8xf32> -> vector<8x32xf32>
    %c0_59 = arith.constant 0 : index
    %c0_60 = arith.constant 0 : index
    %124 = vector.load %arg13[%c0_59, %c0_60] : memref<8x32xf32, #tpu.memory_space<vmem>>, vector<8x32xf32>
    %125 = arith.index_cast %arg2 : i32 to index
    %c0_61 = arith.constant 0 : index
    %c0_62 = arith.constant 0 : index
    %126 = vector.load %arg8[%125, %c0_61, %c0_62] : memref<1x32x32xf32, #tpu.memory_space<vmem>>, vector<1x32x32xf32>
    %127 = vector.shape_cast %126 : vector<1x32x32xf32> to vector<32x32xf32>
    %cst_63 = arith.constant dense<0.000000e+00> : vector<8x32xf32>
    %128 = tpu.matmul %123, %127, %cst_63 {dimension_numbers = #tpu.dot_dimension_numbers<[1], [0], [0], [1], [0, 0, 1, 1], [], []>} : vector<8x32xf32>, vector<32x32xf32>, vector<8x32xf32> -> vector<8x32xf32>
    %129 = arith.addf %124, %128 : vector<8x32xf32>
    %c0_64 = arith.constant 0 : index
    %c0_65 = arith.constant 0 : index
    %130 = vector.load %arg13[%c0_64, %c0_65] : memref<8x32xf32, #tpu.memory_space<vmem>>, vector<8x32xf32>
    tpu.vector_store %arg13[%c0_64, %c0_65], %129 {strides = array<i32>} : memref<8x32xf32, #tpu.memory_space<vmem>>, vector<8x32xf32>,
    %c0_i32_66 = arith.constant 0 : i32
    %131 = arith.cmpi eq, %arg2, %c0_i32_66 : i32
    %132 = arith.extui %131 : i1 to i32
    %c0_i32_67 = arith.constant 0 : i32
    %133 = arith.cmpi ne, %132, %c0_i32_67 : i32
    scf.if %133 {
      %c0_68 = arith.constant 0 : index
      %c0_69 = arith.constant 0 : index
      %134 = vector.load %arg13[%c0_68, %c0_69] : memref<8x32xf32, #tpu.memory_space<vmem>>, vector<8x32xf32>
      %c0_70 = arith.constant 0 : index
      %c0_71 = arith.constant 0 : index
      %c0_72 = arith.constant 0 : index
      %135 = vector.load %arg10[%c0_70, %c0_71, %c0_72] : memref<1x8x32xf32, #tpu.memory_space<vmem>>, vector<1x8x32xf32>
      %136 = vector.shape_cast %135 : vector<1x8x32xf32> to vector<8x32xf32>
      %137 = vector.shape_cast %134 : vector<8x32xf32> to vector<1x8x32xf32>
      tpu.vector_store %arg10[%c0_70, %c0_71, %c0_72], %137 {strides = array<i32>} : memref<1x8x32xf32, #tpu.memory_space<vmem>>, vector<1x8x32xf32>,
    } else {
    }
    return
  }
  func.func @transform_0(%arg0: i32, %arg1: i32, %arg2: i32) -> (i32, i32, i32) {
    %c0_i32 = arith.constant 0 : i32
    %c0_i32_0 = arith.constant 0 : i32
    %c0_i32_1 = arith.constant 0 : i32
    return %arg0, %c0_i32, %c0_i32_0 : i32, i32, i32
  }
  func.func @transform_1(%arg0: i32, %arg1: i32, %arg2: i32) -> (i32, i32, i32) {
    %c0_i32 = arith.constant 0 : i32
    %c0_i32_0 = arith.constant 0 : i32
    %c0_i32_1 = arith.constant 0 : i32
    %c0_i32_2 = arith.constant 0 : i32
    return %c0_i32, %c0_i32_0, %c0_i32_1 : i32, i32, i32
  }
  func.func @transform_2(%arg0: i32, %arg1: i32, %arg2: i32) -> (i32, i32, i32) {
    %c0_i32 = arith.constant 0 : i32
    %c0_i32_0 = arith.constant 0 : i32
    %c0_i32_1 = arith.constant 0 : i32
    %c0_i32_2 = arith.constant 0 : i32
    return %c0_i32, %c0_i32_0, %c0_i32_1 : i32, i32, i32
  }
  func.func @transform_3(%arg0: i32, %arg1: i32, %arg2: i32) -> (i32, i32, i32) {
    %c0_i32 = arith.constant 0 : i32
    %c0_i32_0 = arith.constant 0 : i32
    %c0_i32_1 = arith.constant 0 : i32
    %c0_i32_2 = arith.constant 0 : i32
    return %c0_i32, %c0_i32_0, %c0_i32_1 : i32, i32, i32
  }
  func.func @transform_4(%arg0: i32, %arg1: i32, %arg2: i32) -> (i32, i32, i32) {
    %c0_i32 = arith.constant 0 : i32
    %c0_i32_0 = arith.constant 0 : i32
    %c0_i32_1 = arith.constant 0 : i32
    %c0_i32_2 = arith.constant 0 : i32
    return %c0_i32, %c0_i32_0, %c0_i32_1 : i32, i32, i32
  }
  func.func @transform_5(%arg0: i32, %arg1: i32, %arg2: i32) -> (i32, i32, i32) {
    %c0_i32 = arith.constant 0 : i32
    %c0_i32_0 = arith.constant 0 : i32
    %c0_i32_1 = arith.constant 0 : i32
    %c0_i32_2 = arith.constant 0 : i32
    return %c0_i32, %c0_i32_0, %c0_i32_1 : i32, i32, i32
  }
  func.func @transform_6(%arg0: i32, %arg1: i32, %arg2: i32) -> (i32, i32) {
    %c0_i32 = arith.constant 0 : i32
    %c0_i32_0 = arith.constant 0 : i32
    %c0_i32_1 = arith.constant 0 : i32
    return %c0_i32, %c0_i32_0 : i32, i32
  }
  func.func @transform_7(%arg0: i32, %arg1: i32, %arg2: i32) -> (i32, i32, i32) {
    %c0_i32 = arith.constant 0 : i32
    %c0_i32_0 = arith.constant 0 : i32
    return %arg0, %arg1, %c0_i32 : i32, i32, i32
  }
}

</mosaic_0001>

<llo_original>
// kernel: tpu_custom_call.1
$region0: #{tpu_custom_call.1}
  #allocation0 [shape = 'u32[]', space=smem, size = 0x4, offset = 0x4, fixed_abs, tag = 'smem constant byte address 0x4 - core index']
  #allocation1 [shape = 'u32[144,128]{1,0:T(1,128)}', space=vmem, size = 0x12000, scoped, tag = 'internal scratch']
  #allocation2 [shape = 'f32[4,8,8]{2,1,0:T(8,128)}', space=vmem, size = 0x4000, scoped, tag = 'scratch operand']
  #allocation3 [shape = 'f32[4,8,8]{2,1,0:T(8,128)}', space=vmem, size = 0x4000, scoped, tag = 'scratch operand']
  #allocation4 [shape = 'f32[8,32]{1,0:T(8,128)}', space=vmem, size = 0x1000, scoped, tag = 'scratch operand']
  %s0 = inlined_call_operand.vmem [shape: f32[2,8,32], index: 0, kind: input, shape index: {}]
  %s1 = inlined_call_operand.vmem [shape: f32[4,32,8], index: 1, kind: input, shape index: {}]
  %s2 = inlined_call_operand.vmem [shape: f32[4,1,8], index: 2, kind: input, shape index: {}]
  %s3 = inlined_call_operand.vmem [shape: f32[4,32,16], index: 3, kind: input, shape index: {}]
  %s4 = inlined_call_operand.vmem [shape: f32[4,1,16], index: 4, kind: input, shape index: {}]
  %s5 = inlined_call_operand.vmem [shape: f32[1,32,32], index: 5, kind: input, shape index: {}]
  %s6 = inlined_call_operand.vmem [shape: f32[1,32], index: 6, kind: input, shape index: {}]
  %s7 = inlined_call_operand.hbm [shape: f32[2,8,32], index: 7, kind: output, shape index: {}]
  %s8 = sld [smem:[#allocation0]]
  $region73: #{tpu_custom_call.1} parent=0
    _
  %s10 = ssub.s32 1, %s8
  %s11 = scalar_select 0, %s10, %s8
  $region1: #{tpu_custom_call.1} parent=0
    #allocation5 [shape = 'u8[8192]{0}', space=vmem, size = 0x2000, scoped, tag = 'output window, operand 0']
    #allocation6 [shape = 's32[2]{0}', space=sflag, size = 0x8, scoped, tag = 'scoped memory for tpu_custom_call.1']
    %12 = vsyncpa [#allocation6], 0
    %s13 = scalar_lea.sflag [#allocation6], 1
    %14 = vsyncpa %s13, 0
    loop: start=0, step=1, limit=4
    $region2: #{tpu_custom_call.1} parent=1 // loop_pre_header
      _
    $region3: #{tpu_custom_call.1} parent=1 // loop_header
      %s16 = sphi 0, %s20
      %p17 = scmp.ge.s32.totalorder %s16, 4
      %s23 = sphi 0, %s42
      %s24 = sphi 0, %s38
      %s25 = sphi 0, %s34
      %s26 = sphi 0, %s23
      %s27 = sphi 0, %s24
      %s28 = sphi 0, %s25
      %s29 = sphi 0, %s26
      %s30 = sphi 0, %s27
      %s31 = sphi 0, %s28
      %s45 = sphi 0, %s47
      %s48 = sphi 0, %s45
      %s49 = sphi 0, %s48
      %s65 = sphi 0, %s49
      %s69 = sphi 0, %s69
      %s71 = sphi 0, %s69
      %s72 = sphi 0, %s71
      %s86 = sphi 0, %s72
      %s90 = sphi 0, %s90
      %s92 = sphi 0, %s90
      %s93 = sphi 0, %s92
      %s107 = sphi 0, %s93
      %s111 = sphi 0, %s111
      %s113 = sphi 0, %s111
      %s114 = sphi 0, %s113
      %s128 = sphi 0, %s114
      %s132 = sphi 0, %s132
      %s134 = sphi 0, %s132
      %s135 = sphi 0, %s134
      %s149 = sphi 0, %s135
      %s153 = sphi 0, %s153
      %s155 = sphi 0, %s153
      %s156 = sphi 0, %s155
      %s170 = sphi 0, %s156
      %s174 = sphi 0, %s174
      %s176 = sphi 0, %s174
      %s177 = sphi 0, %s176
      %s191 = sphi 0, %s177
      %s199 = sphi 0, %s201
      %s202 = sphi 0, %s199
      %s203 = sphi 0, %s202
      %s219 = sphi 0, %s203
    $region4: #{tpu_custom_call.1} parent=1 // loop_header_branch
      %19 = sbr.rel (%p17) target = $region8
    $region5: #{tpu_custom_call.1} parent=1 // loop_body
      %s21 = ssub.s32 %s16, 1
      %s22 = ssub.s32 %s16, 2
      %s32 = sadd.s32 1, %s25
      %p33 = scmp.ge.s32.totalorder %s32, 1
      %s34 = scalar_select %p33, 0, %s32
      %s35 = sadd.s32 1, %s24
      %s36 = scalar_select %p33, %s35, %s24
      %p37 = scmp.ge.s32.totalorder %s36, 1
      %s38 = scalar_select %p37, 0, %s36
      %s39 = sadd.s32 1, %s23
      %s40 = scalar_select %p37, %s39, %s23
      %p41 = scmp.ge.s32.totalorder %s40, 2
      %s42 = scalar_select %p41, 0, %s40
      %s43 = ssub.s32 %s23, %s42
      %p44 = scmp.eq.s32.totalorder %s43, 0
      %s46 = sadd.s32 %s45, 1
      %s47 = scalar_select %p44, %s45, %s46
      %p50 = pneg %p44
      %p51 = scmp.eq.s32.totalorder %s16, 1
      %p52 = por %p50, %p51
      %p53 = scmp.ne.s32.totalorder %s45, %s48
      %p54 = scmp.eq.s32.totalorder %s16, 0
      %p55 = por %p53, %p54
      %p56 = scmp.ne.s32.totalorder %s45, %s48
      %p57 = scmp.eq.s32.totalorder %s21, 1
      %p58 = por %p56, %p57
      %p59 = scmp.ne.s32.totalorder %s48, %s49
      %p60 = scmp.eq.s32.totalorder %s21, 0
      %p61 = por %p59, %p60
      %p62 = scmp.ne.s32.totalorder %s48, %s49
      %p63 = scmp.eq.s32.totalorder %s22, 1
      %p64 = por %p62, %p63
      %p66 = scmp.ne.s32.totalorder %s49, %s65
      %p67 = scmp.eq.s32.totalorder %s22, 0
      %p68 = por %p66, %p67
      %s70 = sadd.s32 %s69, 1
      %p73 = scmp.eq.s32.totalorder %s16, 1
      %p74 = scmp.ne.s32.totalorder %s69, %s71
      %p75 = scmp.eq.s32.totalorder %s16, 0
      %p76 = por %p74, %p75
      %p77 = scmp.ne.s32.totalorder %s69, %s71
      %p78 = scmp.eq.s32.totalorder %s21, 1
      %p79 = por %p77, %p78
      %p80 = scmp.ne.s32.totalorder %s71, %s72
      %p81 = scmp.eq.s32.totalorder %s21, 0
      %p82 = por %p80, %p81
      %p83 = scmp.ne.s32.totalorder %s71, %s72
      %p84 = scmp.eq.s32.totalorder %s22, 1
      %p85 = por %p83, %p84
      %p87 = scmp.ne.s32.totalorder %s72, %s86
      %p88 = scmp.eq.s32.totalorder %s22, 0
      %p89 = por %p87, %p88
      %s91 = sadd.s32 %s90, 1
      %p94 = scmp.eq.s32.totalorder %s16, 1
      %p95 = scmp.ne.s32.totalorder %s90, %s92
      %p96 = scmp.eq.s32.totalorder %s16, 0
      %p97 = por %p95, %p96
      %p98 = scmp.ne.s32.totalorder %s90, %s92
      %p99 = scmp.eq.s32.totalorder %s21, 1
      %p100 = por %p98, %p99
      %p101 = scmp.ne.s32.totalorder %s92, %s93
      %p102 = scmp.eq.s32.totalorder %s21, 0
      %p103 = por %p101, %p102
      %p104 = scmp.ne.s32.totalorder %s92, %s93
      %p105 = scmp.eq.s32.totalorder %s22, 1
      %p106 = por %p104, %p105
      %p108 = scmp.ne.s32.totalorder %s93, %s107
      %p109 = scmp.eq.s32.totalorder %s22, 0
      %p110 = por %p108, %p109
      %s112 = sadd.s32 %s111, 1
      %p115 = scmp.eq.s32.totalorder %s16, 1
      %p116 = scmp.ne.s32.totalorder %s111, %s113
      %p117 = scmp.eq.s32.totalorder %s16, 0
      %p118 = por %p116, %p117
      %p119 = scmp.ne.s32.totalorder %s111, %s113
      %p120 = scmp.eq.s32.totalorder %s21, 1
      %p121 = por %p119, %p120
      %p122 = scmp.ne.s32.totalorder %s113, %s114
      %p123 = scmp.eq.s32.totalorder %s21, 0
      %p124 = por %p122, %p123
      %p125 = scmp.ne.s32.totalorder %s113, %s114
      %p126 = scmp.eq.s32.totalorder %s22, 1
      %p127 = por %p125, %p126
      %p129 = scmp.ne.s32.totalorder %s114, %s128
      %p130 = scmp.eq.s32.totalorder %s22, 0
      %p131 = por %p129, %p130
      %s133 = sadd.s32 %s132, 1
      %p136 = scmp.eq.s32.totalorder %s16, 1
      %p137 = scmp.ne.s32.totalorder %s132, %s134
      %p138 = scmp.eq.s32.totalorder %s16, 0
      %p139 = por %p137, %p138
      %p140 = scmp.ne.s32.totalorder %s132, %s134
      %p141 = scmp.eq.s32.totalorder %s21, 1
      %p142 = por %p140, %p141
      %p143 = scmp.ne.s32.totalorder %s134, %s135
      %p144 = scmp.eq.s32.totalorder %s21, 0
      %p145 = por %p143, %p144
      %p146 = scmp.ne.s32.totalorder %s134, %s135
      %p147 = scmp.eq.s32.totalorder %s22, 1
      %p148 = por %p146, %p147
      %p150 = scmp.ne.s32.totalorder %s135, %s149
      %p151 = scmp.eq.s32.totalorder %s22, 0
      %p152 = por %p150, %p151
      %s154 = sadd.s32 %s153, 1
      %p157 = scmp.eq.s32.totalorder %s16, 1
      %p158 = scmp.ne.s32.totalorder %s153, %s155
      %p159 = scmp.eq.s32.totalorder %s16, 0
      %p160 = por %p158, %p159
      %p161 = scmp.ne.s32.totalorder %s153, %s155
      %p162 = scmp.eq.s32.totalorder %s21, 1
      %p163 = por %p161, %p162
      %p164 = scmp.ne.s32.totalorder %s155, %s156
      %p165 = scmp.eq.s32.totalorder %s21, 0
      %p166 = por %p164, %p165
      %p167 = scmp.ne.s32.totalorder %s155, %s156
      %p168 = scmp.eq.s32.totalorder %s22, 1
      %p169 = por %p167, %p168
      %p171 = scmp.ne.s32.totalorder %s156, %s170
      %p172 = scmp.eq.s32.totalorder %s22, 0
      %p173 = por %p171, %p172
      %s175 = sadd.s32 %s174, 1
      %p178 = scmp.eq.s32.totalorder %s16, 1
      %p179 = scmp.ne.s32.totalorder %s174, %s176
      %p180 = scmp.eq.s32.totalorder %s16, 0
      %p181 = por %p179, %p180
      %p182 = scmp.ne.s32.totalorder %s174, %s176
      %p183 = scmp.eq.s32.totalorder %s21, 1
      %p184 = por %p182, %p183
      %p185 = scmp.ne.s32.totalorder %s176, %s177
      %p186 = scmp.eq.s32.totalorder %s21, 0
      %p187 = por %p185, %p186
      %p188 = scmp.ne.s32.totalorder %s176, %s177
      %p189 = scmp.eq.s32.totalorder %s22, 1
      %p190 = por %p188, %p189
      %p192 = scmp.ne.s32.totalorder %s177, %s191
      %p193 = scmp.eq.s32.totalorder %s22, 0
      %p194 = por %p192, %p193
      %s195 = ssub.s32 %s23, %s42
      %s196 = ssub.s32 %s24, %s38
      %s197 = sor.u32 %s195, %s196
      %p198 = scmp.eq.s32.totalorder %s197, 0
      %s200 = sadd.s32 %s199, 1
      %s201 = scalar_select %p198, %s199, %s200
      %p204 = pneg %p198
      %p205 = scmp.eq.s32.totalorder %s16, 1
      %p206 = por %p204, %p205
      %p207 = scmp.ne.s32.totalorder %s199, %s202
      %p208 = scmp.eq.s32.totalorder %s16, 0
      %p209 = por %p207, %p208
      %p210 = scmp.ne.s32.totalorder %s199, %s202
      %p211 = scmp.eq.s32.totalorder %s21, 1
      %p212 = por %p210, %p211
      %p213 = scmp.ne.s32.totalorder %s202, %s203
      %p214 = scmp.eq.s32.totalorder %s21, 0
      %p215 = por %p213, %p214
      %p216 = scmp.ne.s32.totalorder %s202, %s203
      %p217 = scmp.eq.s32.totalorder %s22, 1
      %p218 = por %p216, %p217
      %p220 = scmp.ne.s32.totalorder %s203, %s219
      %p221 = scmp.eq.s32.totalorder %s22, 0
      %p222 = por %p220, %p221
      %p223 = scmp.le.s32.totalorder 1, %s16
      %p224 = scmp.lt.s32.totalorder %s16, 3
      %p225 = pnand %p223, %p224
      %p226 = pneg %p225
      // Predicated region
      $region9: #{tpu_custom_call.1} parent=5 // pred_check
        _
      $region10: #{tpu_custom_call.1} parent=5 // pred_check_branch
        %228 = sbr.rel (%p225) target = $region12
      $region11: #{tpu_custom_call.1} parent=5 // pred_region
        %s229 = ssub.s32 %s16, 1
        // Predicated region
        $region13: #{tpu_custom_call.1} parent=11 // pred_check
          %p230 = pneg %p82
        $region14: #{tpu_custom_call.1} parent=11 // pred_check_branch
          %232 = sbr.rel (%p230) target = $region16
        $region15: #{tpu_custom_call.1} parent=11 // pred_region
          _
        $region16: #{tpu_custom_call.1} parent=11 // pred_fallthru
          _
        // Predicated region
        $region17: #{tpu_custom_call.1} parent=11 // pred_check
          %p233 = pneg %p103
        $region18: #{tpu_custom_call.1} parent=11 // pred_check_branch
          %235 = sbr.rel (%p233) target = $region20
        $region19: #{tpu_custom_call.1} parent=11 // pred_region
          _
        $region20: #{tpu_custom_call.1} parent=11 // pred_fallthru
          _
        // Predicated region
        $region21: #{tpu_custom_call.1} parent=11 // pred_check
          %p236 = pneg %p124
        $region22: #{tpu_custom_call.1} parent=11 // pred_check_branch
          %238 = sbr.rel (%p236) target = $region24
        $region23: #{tpu_custom_call.1} parent=11 // pred_region
          _
        $region24: #{tpu_custom_call.1} parent=11 // pred_fallthru
          _
        // Predicated region
        $region25: #{tpu_custom_call.1} parent=11 // pred_check
          %p239 = pneg %p145
        $region26: #{tpu_custom_call.1} parent=11 // pred_check_branch
          %241 = sbr.rel (%p239) target = $region28
        $region27: #{tpu_custom_call.1} parent=11 // pred_region
          _
        $region28: #{tpu_custom_call.1} parent=11 // pred_fallthru
          _
        // Predicated region
        $region29: #{tpu_custom_call.1} parent=11 // pred_check
          %p242 = pneg %p166
        $region30: #{tpu_custom_call.1} parent=11 // pred_check_branch
          %244 = sbr.rel (%p242) target = $region32
        $region31: #{tpu_custom_call.1} parent=11 // pred_region
          _
        $region32: #{tpu_custom_call.1} parent=11 // pred_fallthru
          _
        // Predicated region
        $region33: #{tpu_custom_call.1} parent=11 // pred_check
          %p245 = pneg %p187
        $region34: #{tpu_custom_call.1} parent=11 // pred_check_branch
          %247 = sbr.rel (%p245) target = $region36
        $region35: #{tpu_custom_call.1} parent=11 // pred_region
          _
        $region36: #{tpu_custom_call.1} parent=11 // pred_fallthru
          _
      $region12: #{tpu_custom_call.1} parent=5 // pred_fallthru
        _
      %p248 = scmp.lt.s32.totalorder %s16, 2
      // Predicated region
      $region37: #{tpu_custom_call.1} parent=5 // pred_check
        %p249 = pneg %p248
      $region38: #{tpu_custom_call.1} parent=5 // pred_check_branch
        %251 = sbr.rel (%p249) target = $region40
      $region39: #{tpu_custom_call.1} parent=5 // pred_region
        // Predicated region
        $region41: #{tpu_custom_call.1} parent=39 // pred_check
          %p252 = pneg %p55
        $region42: #{tpu_custom_call.1} parent=39 // pred_check_branch
          %254 = sbr.rel (%p252) target = $region44
        $region43: #{tpu_custom_call.1} parent=39 // pred_region
          %p255 = scmp.lt.s32.totalorder %s23, 1
          %s256 = scalar_select %p255, %s23, 1
          %s257 = smul.addr %s256, 8
          %s258 = scalar_lea.vmem %s0, %s257
        $region44: #{tpu_custom_call.1} parent=39 // pred_fallthru
          _
      $region40: #{tpu_custom_call.1} parent=5 // pred_fallthru
        _
      %p259 = scmp.le.s32.totalorder 1, %s16
      %p260 = scmp.lt.s32.totalorder %s16, 3
      %p261 = pnand %p259, %p260
      %p262 = pneg %p261
      // Predicated region
      $region45: #{tpu_custom_call.1} parent=5 // pred_check
        _
      $region46: #{tpu_custom_call.1} parent=5 // pred_check_branch
        %264 = sbr.rel (%p261) target = $region48
      $region47: #{tpu_custom_call.1} parent=5 // pred_region
        %s265 = ssub.s32 %s16, 1
        %p266 = scmp.lt.s32.totalorder %s26, 1
        %s267 = scalar_select %p266, %s26, 1
        %s268 = smul.addr %s267, 8
        %s269 = scalar_lea.vmem %s0, %s268
        %p270 = pneg %p61
        %p271 = pneg %p58
        %p272 = pneg %p82
        %p273 = pneg %p79
        %p274 = pneg %p103
        %p275 = pneg %p100
        %p276 = pneg %p124
        %p277 = pneg %p121
        %p278 = pneg %p145
        %p279 = pneg %p142
        %p280 = pneg %p166
        %p281 = pneg %p163
        %p282 = pneg %p187
        %p283 = pneg %p184
        %p284 = pneg %p215
        %p285 = pneg %p212
        %s286 = sand.u32 %s202, 1
        %s287 = scalar_lea.sflag [#allocation6], %s286
        %s288 = sand.u32 %s202, 1
        %s289 = smul.addr %s288, 8
        %s290 = scalar_lea.vmem [#allocation5], %s289
        %p291 = scmp.lt.s32.totalorder %s26, 1
        %s292 = scalar_select %p291, %s26, 1
        %s293 = smul.addr %s292, 8
        %s294 = scalar_lea.vmem %s0, %s293
        %p295 = scmp.eq.s32.totalorder %s28, 0
        // Predicated region
        $region49: #{tpu_custom_call.1} parent=47 // pred_check
          %p296 = pneg %p295
        $region50: #{tpu_custom_call.1} parent=47 // pred_check_branch
          %298 = sbr.rel (%p296) target = $region52
        $region51: #{tpu_custom_call.1} parent=47 // pred_region
          %v299 = vld [vmem:[%s6] sm:$0x1]
          %v301 = vlaneseq
          %v302 = vshrl.u32 %v301, 7
          %v303 = vsub.s32 0, %v302
          %v304 = vrot.slane %v299, %v303
          %vm306 = vcmask 261120
          %307 = vst.msk [vmem:[#allocation4] sm:$0xff] %vm306, %v304
        $region52: #{tpu_custom_call.1} parent=47 // pred_fallthru
          _
        %p308 = scmp.eq.s32.totalorder %s27, 0
        // Predicated region
        $region53: #{tpu_custom_call.1} parent=47 // pred_check
          %p309 = pneg %p308
        $region54: #{tpu_custom_call.1} parent=47 // pred_check_branch
          %311 = sbr.rel (%p309) target = $region56
        $region55: #{tpu_custom_call.1} parent=47 // pred_region
          %v312 = vld [vmem:[%s294] sm:$0xff]
          %s313 = smul.u32 %s28, 4
          %s314 = smul.u32 %s313, 32
          %s315 = scalar_lea.vmem %s3, %s314
          %v316 = vld [vmem:[%s315] sm:$0xff]
          %v317 = vld [vmem:[%s315 + $0x8] sm:$0xff]
          %v318 = vld [vmem:[%s315 + $0x10] sm:$0xff]
          %v319 = vld [vmem:[%s315 + $0x18] sm:$0xff]
          %s320 = scalar_lea.vmem %s4, %s313
          %v321 = vld [vmem:[%s320] sm:$0x1]
          %v323 = vlaneseq
          %v324 = vshrl.u32 %v323, 7
          %v325 = vsub.s32 0, %v324
          %v326 = vrot.slane %v321, %v325
          %vm328 = vcmask 261120
          %v330 = vsel %vm328, %v312, 0
          %332 = vmatprep.subr.mxu0 0.0
          %333 = vmatpush1.msra.mxu0 0.0
          %334 = vmatprep.subr.mxu0 0.0
          %335 = vmatpush1.msra.mxu0 0.0
          %336 = vmatprep.subr.mxu0 0.0
          %337 = vmatpush1.msra.mxu0 0.0
          %338 = vmatprep.subr.mxu0 0.0
          %339 = vmatpush1.msra.mxu0 0.0
          %340 = vmatprep.subr.mxu0 0.0
          %341 = vmatpush1.msra.mxu0 0.0
          %342 = vmatprep.subr.mxu0 0.0
          %343 = vmatpush1.msra.mxu0 0.0
          %344 = vmatprep.subr.mxu0 0.0
          %345 = vmatpush1.msra.mxu0 0.0
          %346 = vmatprep.subr.mxu0 0.0
          %347 = vmatpush1.msra.mxu0 0.0
          %348 = vmatprep.subr.mxu0 0.0
          %349 = vmatpush1.msra.mxu0 0.0
          %350 = vmatprep.subr.mxu0 0.0
          %351 = vmatpush1.msra.mxu0 0.0
          %352 = vmatprep.subr.mxu0 0.0
          %353 = vmatpush1.msra.mxu0 0.0
          %354 = vmatprep.subr.mxu0 0.0
          %355 = vmatpush1.msra.mxu0 0.0
          %356 = vmatprep.subr.mxu0 0.0
          %357 = vmatpush1.msra.mxu0 %v319
          %358 = vmatprep.subr.mxu0 0.0
          %359 = vmatpush1.msra.mxu0 %v318
          %360 = vmatprep.subr.mxu0 0.0
          %361 = vmatpush1.msra.mxu0 %v317
          %362 = vmatprep.subr.mxu0 0.0
          %363 = vmatpush1.msra.mxu0 %v316
          %364 = vmatprep.subr.mxu0 0.0
          %365 = vmatpush2.msra.mxu0 0.0
          %366 = vmatprep.subr.mxu0 0.0
          %367 = vmatpush2.msra.mxu0 0.0
          %368 = vmatprep.subr.mxu0 0.0
          %369 = vmatpush2.msra.mxu0 0.0
          %370 = vmatprep.subr.mxu0 0.0
          %371 = vmatpush2.msra.mxu0 0.0
          %372 = vmatprep.subr.mxu0 0.0
          %373 = vmatpush2.msra.mxu0 0.0
          %374 = vmatprep.subr.mxu0 0.0
          %375 = vmatpush2.msra.mxu0 0.0
          %376 = vmatprep.subr.mxu0 0.0
          %377 = vmatpush2.msra.mxu0 0.0
          %378 = vmatprep.subr.mxu0 0.0
          %379 = vmatpush2.msra.mxu0 0.0
          %380 = vmatprep.subr.mxu0 0.0
          %381 = vmatpush2.msra.mxu0 0.0
          %382 = vmatprep.subr.mxu0 0.0
          %383 = vmatpush2.msra.mxu0 0.0
          %384 = vmatprep.subr.mxu0 0.0
          %385 = vmatpush2.msra.mxu0 0.0
          %386 = vmatprep.subr.mxu0 0.0
          %387 = vmatpush2.msra.mxu0 0.0
          %388 = vmatprep.subr.mxu0 0.0
          %389 = vmatpush2.msra.mxu0 0.0
          %390 = vmatprep.subr.mxu0 0.0
          %391 = vmatpush2.msra.mxu0 0.0
          %392 = vmatprep.subr.mxu0 0.0
          %393 = vmatpush2.msra.mxu0 0.0
          %394 = vmatprep.subr.mxu0 0.0
          %395 = vmatpush2.msra.mxu0 0.0
          %396 = vmatprep.mubr.f32.mxu0 0.0
          %397 = vmatmul.mubr.f32.gmra.mxu0 %v330
          %v398 = vpop.f32.mrf.mxu0
          %v399 = vadd.f32 %v326, %v398
          %v400 = vpop.f32.mrf.mxu0
          %401 = vdwg.mxu0
          %s402 = smul.u32 %s313, 8
          %s403 = scalar_lea.vmem [#allocation2], %s402
          %vm404 = vcmask 64512
          %405 = vst.msk [vmem:[%s403] sm:$0xff] %vm404, %v399
          %407 = vrot.lane.b32.xlu0 %v399, 120
          %v408 = vpop.permute.xlu0 %407
          %s410 = scalar_lea.vmem [#allocation3], %s402
          %411 = vst.msk [vmem:[%s410] sm:$0xff] %vm404, %v408
          %s412 = sadd.s32 %s313, 1
          %s413 = smul.u32 %s412, 32
          %s414 = scalar_lea.vmem %s3, %s413
          %v415 = vld [vmem:[%s414] sm:$0xff]
          %v416 = vld [vmem:[%s414 + $0x8] sm:$0xff]
          %v417 = vld [vmem:[%s414 + $0x10] sm:$0xff]
          %v418 = vld [vmem:[%s414 + $0x18] sm:$0xff]
          %s419 = scalar_lea.vmem %s4, %s412
          %v420 = vld [vmem:[%s419] sm:$0x1]
          %v422 = vlaneseq
          %v423 = vshrl.u32 %v422, 7
          %v424 = vsub.s32 0, %v423
          %v425 = vrot.slane %v420, %v424
          %427 = vmatprep.subr.mxu0 0.0
          %428 = vmatpush1.msra.mxu0 0.0
          %429 = vmatprep.subr.mxu0 0.0
          %430 = vmatpush1.msra.mxu0 0.0
          %431 = vmatprep.subr.mxu0 0.0
          %432 = vmatpush1.msra.mxu0 0.0
          %433 = vmatprep.subr.mxu0 0.0
          %434 = vmatpush1.msra.mxu0 0.0
          %435 = vmatprep.subr.mxu0 0.0
          %436 = vmatpush1.msra.mxu0 0.0
          %437 = vmatprep.subr.mxu0 0.0
          %438 = vmatpush1.msra.mxu0 0.0
          %439 = vmatprep.subr.mxu0 0.0
          %440 = vmatpush1.msra.mxu0 0.0
          %441 = vmatprep.subr.mxu0 0.0
          %442 = vmatpush1.msra.mxu0 0.0
          %443 = vmatprep.subr.mxu0 0.0
          %444 = vmatpush1.msra.mxu0 0.0
          %445 = vmatprep.subr.mxu0 0.0
          %446 = vmatpush1.msra.mxu0 0.0
          %447 = vmatprep.subr.mxu0 0.0
          %448 = vmatpush1.msra.mxu0 0.0
          %449 = vmatprep.subr.mxu0 0.0
          %450 = vmatpush1.msra.mxu0 0.0
          %451 = vmatprep.subr.mxu0 0.0
          %452 = vmatpush1.msra.mxu0 %v418
          %453 = vmatprep.subr.mxu0 0.0
          %454 = vmatpush1.msra.mxu0 %v417
          %455 = vmatprep.subr.mxu0 0.0
          %456 = vmatpush1.msra.mxu0 %v416
          %457 = vmatprep.subr.mxu0 0.0
          %458 = vmatpush1.msra.mxu0 %v415
          %459 = vmatprep.subr.mxu0 0.0
          %460 = vmatpush2.msra.mxu0 0.0
          %461 = vmatprep.subr.mxu0 0.0
          %462 = vmatpush2.msra.mxu0 0.0
          %463 = vmatprep.subr.mxu0 0.0
          %464 = vmatpush2.msra.mxu0 0.0
          %465 = vmatprep.subr.mxu0 0.0
          %466 = vmatpush2.msra.mxu0 0.0
          %467 = vmatprep.subr.mxu0 0.0
          %468 = vmatpush2.msra.mxu0 0.0
          %469 = vmatprep.subr.mxu0 0.0
          %470 = vmatpush2.msra.mxu0 0.0
          %471 = vmatprep.subr.mxu0 0.0
          %472 = vmatpush2.msra.mxu0 0.0
          %473 = vmatprep.subr.mxu0 0.0
          %474 = vmatpush2.msra.mxu0 0.0
          %475 = vmatprep.subr.mxu0 0.0
          %476 = vmatpush2.msra.mxu0 0.0
          %477 = vmatprep.subr.mxu0 0.0
          %478 = vmatpush2.msra.mxu0 0.0
          %479 = vmatprep.subr.mxu0 0.0
          %480 = vmatpush2.msra.mxu0 0.0
          %481 = vmatprep.subr.mxu0 0.0
          %482 = vmatpush2.msra.mxu0 0.0
          %483 = vmatprep.subr.mxu0 0.0
          %484 = vmatpush2.msra.mxu0 0.0
          %485 = vmatprep.subr.mxu0 0.0
          %486 = vmatpush2.msra.mxu0 0.0
          %487 = vmatprep.subr.mxu0 0.0
          %488 = vmatpush2.msra.mxu0 0.0
          %489 = vmatprep.subr.mxu0 0.0
          %490 = vmatpush2.msra.mxu0 0.0
          %491 = vmatprep.mubr.f32.mxu0 0.0
          %492 = vmatmul.mubr.f32.gmra.mxu0 %v330
          %v493 = vpop.f32.mrf.mxu0
          %v494 = vadd.f32 %v425, %v493
          %v495 = vpop.f32.mrf.mxu0
          %496 = vdwg.mxu0
          %s497 = smul.u32 %s412, 8
          %s498 = scalar_lea.vmem [#allocation2], %s497
          %499 = vst.msk [vmem:[%s498] sm:$0xff] %vm404, %v494
          %501 = vrot.lane.b32.xlu0 %v494, 120
          %v502 = vpop.permute.xlu0 %501
          %s504 = scalar_lea.vmem [#allocation3], %s497
          %505 = vst.msk [vmem:[%s504] sm:$0xff] %vm404, %v502
          %s506 = sadd.s32 %s313, 2
          %s507 = smul.u32 %s506, 32
          %s508 = scalar_lea.vmem %s3, %s507
          %v509 = vld [vmem:[%s508] sm:$0xff]
          %v510 = vld [vmem:[%s508 + $0x8] sm:$0xff]
          %v511 = vld [vmem:[%s508 + $0x10] sm:$0xff]
          %v512 = vld [vmem:[%s508 + $0x18] sm:$0xff]
          %s513 = scalar_lea.vmem %s4, %s506
          %v514 = vld [vmem:[%s513] sm:$0x1]
          %v516 = vlaneseq
          %v517 = vshrl.u32 %v516, 7
          %v518 = vsub.s32 0, %v517
          %v519 = vrot.slane %v514, %v518
          %521 = vmatprep.subr.mxu0 0.0
          %522 = vmatpush1.msra.mxu0 0.0
          %523 = vmatprep.subr.mxu0 0.0
          %524 = vmatpush1.msra.mxu0 0.0
          %525 = vmatprep.subr.mxu0 0.0
          %526 = vmatpush1.msra.mxu0 0.0
          %527 = vmatprep.subr.mxu0 0.0
          %528 = vmatpush1.msra.mxu0 0.0
          %529 = vmatprep.subr.mxu0 0.0
          %530 = vmatpush1.msra.mxu0 0.0
          %531 = vmatprep.subr.mxu0 0.0
          %532 = vmatpush1.msra.mxu0 0.0
          %533 = vmatprep.subr.mxu0 0.0
          %534 = vmatpush1.msra.mxu0 0.0
          %535 = vmatprep.subr.mxu0 0.0
          %536 = vmatpush1.msra.mxu0 0.0
          %537 = vmatprep.subr.mxu0 0.0
          %538 = vmatpush1.msra.mxu0 0.0
          %539 = vmatprep.subr.mxu0 0.0
          %540 = vmatpush1.msra.mxu0 0.0
          %541 = vmatprep.subr.mxu0 0.0
          %542 = vmatpush1.msra.mxu0 0.0
          %543 = vmatprep.subr.mxu0 0.0
          %544 = vmatpush1.msra.mxu0 0.0
          %545 = vmatprep.subr.mxu0 0.0
          %546 = vmatpush1.msra.mxu0 %v512
          %547 = vmatprep.subr.mxu0 0.0
          %548 = vmatpush1.msra.mxu0 %v511
          %549 = vmatprep.subr.mxu0 0.0
          %550 = vmatpush1.msra.mxu0 %v510
          %551 = vmatprep.subr.mxu0 0.0
          %552 = vmatpush1.msra.mxu0 %v509
          %553 = vmatprep.subr.mxu0 0.0
          %554 = vmatpush2.msra.mxu0 0.0
          %555 = vmatprep.subr.mxu0 0.0
          %556 = vmatpush2.msra.mxu0 0.0
          %557 = vmatprep.subr.mxu0 0.0
          %558 = vmatpush2.msra.mxu0 0.0
          %559 = vmatprep.subr.mxu0 0.0
          %560 = vmatpush2.msra.mxu0 0.0
          %561 = vmatprep.subr.mxu0 0.0
          %562 = vmatpush2.msra.mxu0 0.0
          %563 = vmatprep.subr.mxu0 0.0
          %564 = vmatpush2.msra.mxu0 0.0
          %565 = vmatprep.subr.mxu0 0.0
          %566 = vmatpush2.msra.mxu0 0.0
          %567 = vmatprep.subr.mxu0 0.0
          %568 = vmatpush2.msra.mxu0 0.0
          %569 = vmatprep.subr.mxu0 0.0
          %570 = vmatpush2.msra.mxu0 0.0
          %571 = vmatprep.subr.mxu0 0.0
          %572 = vmatpush2.msra.mxu0 0.0
          %573 = vmatprep.subr.mxu0 0.0
          %574 = vmatpush2.msra.mxu0 0.0
          %575 = vmatprep.subr.mxu0 0.0
          %576 = vmatpush2.msra.mxu0 0.0
          %577 = vmatprep.subr.mxu0 0.0
          %578 = vmatpush2.msra.mxu0 0.0
          %579 = vmatprep.subr.mxu0 0.0
          %580 = vmatpush2.msra.mxu0 0.0
          %581 = vmatprep.subr.mxu0 0.0
          %582 = vmatpush2.msra.mxu0 0.0
          %583 = vmatprep.subr.mxu0 0.0
          %584 = vmatpush2.msra.mxu0 0.0
          %585 = vmatprep.mubr.f32.mxu0 0.0
          %586 = vmatmul.mubr.f32.gmra.mxu0 %v330
          %v587 = vpop.f32.mrf.mxu0
          %v588 = vadd.f32 %v519, %v587
          %v589 = vpop.f32.mrf.mxu0
          %590 = vdwg.mxu0
          %s591 = smul.u32 %s506, 8
          %s592 = scalar_lea.vmem [#allocation2], %s591
          %593 = vst.msk [vmem:[%s592] sm:$0xff] %vm404, %v588
          %595 = vrot.lane.b32.xlu0 %v588, 120
          %v596 = vpop.permute.xlu0 %595
          %s598 = scalar_lea.vmem [#allocation3], %s591
          %599 = vst.msk [vmem:[%s598] sm:$0xff] %vm404, %v596
          %s600 = sadd.s32 %s313, 3
          %s601 = smul.u32 %s600, 32
          %s602 = scalar_lea.vmem %s3, %s601
          %v603 = vld [vmem:[%s602] sm:$0xff]
          %v604 = vld [vmem:[%s602 + $0x8] sm:$0xff]
          %v605 = vld [vmem:[%s602 + $0x10] sm:$0xff]
          %v606 = vld [vmem:[%s602 + $0x18] sm:$0xff]
          %s607 = scalar_lea.vmem %s4, %s600
          %v608 = vld [vmem:[%s607] sm:$0x1]
          %v610 = vlaneseq
          %v611 = vshrl.u32 %v610, 7
          %v612 = vsub.s32 0, %v611
          %v613 = vrot.slane %v608, %v612
          %615 = vmatprep.subr.mxu0 0.0
          %616 = vmatpush1.msra.mxu0 0.0
          %617 = vmatprep.subr.mxu0 0.0
          %618 = vmatpush1.msra.mxu0 0.0
          %619 = vmatprep.subr.mxu0 0.0
          %620 = vmatpush1.msra.mxu0 0.0
          %621 = vmatprep.subr.mxu0 0.0
          %622 = vmatpush1.msra.mxu0 0.0
          %623 = vmatprep.subr.mxu0 0.0
          %624 = vmatpush1.msra.mxu0 0.0
          %625 = vmatprep.subr.mxu0 0.0
          %626 = vmatpush1.msra.mxu0 0.0
          %627 = vmatprep.subr.mxu0 0.0
          %628 = vmatpush1.msra.mxu0 0.0
          %629 = vmatprep.subr.mxu0 0.0
          %630 = vmatpush1.msra.mxu0 0.0
          %631 = vmatprep.subr.mxu0 0.0
          %632 = vmatpush1.msra.mxu0 0.0
          %633 = vmatprep.subr.mxu0 0.0
          %634 = vmatpush1.msra.mxu0 0.0
          %635 = vmatprep.subr.mxu0 0.0
          %636 = vmatpush1.msra.mxu0 0.0
          %637 = vmatprep.subr.mxu0 0.0
          %638 = vmatpush1.msra.mxu0 0.0
          %639 = vmatprep.subr.mxu0 0.0
          %640 = vmatpush1.msra.mxu0 %v606
          %641 = vmatprep.subr.mxu0 0.0
          %642 = vmatpush1.msra.mxu0 %v605
          %643 = vmatprep.subr.mxu0 0.0
          %644 = vmatpush1.msra.mxu0 %v604
          %645 = vmatprep.subr.mxu0 0.0
          %646 = vmatpush1.msra.mxu0 %v603
          %647 = vmatprep.subr.mxu0 0.0
          %648 = vmatpush2.msra.mxu0 0.0
          %649 = vmatprep.subr.mxu0 0.0
          %650 = vmatpush2.msra.mxu0 0.0
          %651 = vmatprep.subr.mxu0 0.0
          %652 = vmatpush2.msra.mxu0 0.0
          %653 = vmatprep.subr.mxu0 0.0
          %654 = vmatpush2.msra.mxu0 0.0
          %655 = vmatprep.subr.mxu0 0.0
          %656 = vmatpush2.msra.mxu0 0.0
          %657 = vmatprep.subr.mxu0 0.0
          %658 = vmatpush2.msra.mxu0 0.0
          %659 = vmatprep.subr.mxu0 0.0
          %660 = vmatpush2.msra.mxu0 0.0
          %661 = vmatprep.subr.mxu0 0.0
          %662 = vmatpush2.msra.mxu0 0.0
          %663 = vmatprep.subr.mxu0 0.0
          %664 = vmatpush2.msra.mxu0 0.0
          %665 = vmatprep.subr.mxu0 0.0
          %666 = vmatpush2.msra.mxu0 0.0
          %667 = vmatprep.subr.mxu0 0.0
          %668 = vmatpush2.msra.mxu0 0.0
          %669 = vmatprep.subr.mxu0 0.0
          %670 = vmatpush2.msra.mxu0 0.0
          %671 = vmatprep.subr.mxu0 0.0
          %672 = vmatpush2.msra.mxu0 0.0
          %673 = vmatprep.subr.mxu0 0.0
          %674 = vmatpush2.msra.mxu0 0.0
          %675 = vmatprep.subr.mxu0 0.0
          %676 = vmatpush2.msra.mxu0 0.0
          %677 = vmatprep.subr.mxu0 0.0
          %678 = vmatpush2.msra.mxu0 0.0
          %679 = vmatprep.mubr.f32.mxu0 0.0
          %680 = vmatmul.mubr.f32.gmra.mxu0 %v330
          %v681 = vpop.f32.mrf.mxu0
          %v682 = vadd.f32 %v613, %v681
          %v683 = vpop.f32.mrf.mxu0
          %684 = vdwg.mxu0
          %s685 = smul.u32 %s600, 8
          %s686 = scalar_lea.vmem [#allocation2], %s685
          %687 = vst.msk [vmem:[%s686] sm:$0xff] %vm404, %v682
          %689 = vrot.lane.b32.xlu0 %v682, 120
          %v690 = vpop.permute.xlu0 %689
          %s692 = scalar_lea.vmem [#allocation3], %s685
          %693 = vst.msk [vmem:[%s692] sm:$0xff] %vm404, %v690
        $region56: #{tpu_custom_call.1} parent=47 // pred_fallthru
          _
        %s694 = smul.u32 %s27, 8
        %s695 = scalar_lea.vmem %s294, %s694
        %v696 = vld [vmem:[%s695] sm:$0xff]
        %s697 = smul.u32 %s28, 4
        %s698 = smul.u32 %s697, 32
        %s699 = scalar_lea.vmem %s1, %s698
        %v700 = vld [vmem:[%s699] sm:$0xff]
        %v701 = vld [vmem:[%s699 + $0x8] sm:$0xff]
        %v702 = vld [vmem:[%s699 + $0x10] sm:$0xff]
        %v703 = vld [vmem:[%s699 + $0x18] sm:$0xff]
        %s704 = scalar_lea.vmem %s2, %s697
        %v705 = vld [vmem:[%s704] sm:$0x1]
        %v707 = vlaneseq
        %v708 = vshrl.u32 %v707, 7
        %v709 = vsub.s32 0, %v708
        %v710 = vrot.slane %v705, %v709
        %vm712 = vcmask 261120
        %v714 = vsel %vm712, %v696, 0
        %716 = vmatprep.subr.mxu0 0.0
        %717 = vmatpush1.msra.mxu0 0.0
        %718 = vmatprep.subr.mxu0 0.0
        %719 = vmatpush1.msra.mxu0 0.0
        %720 = vmatprep.subr.mxu0 0.0
        %721 = vmatpush1.msra.mxu0 0.0
        %722 = vmatprep.subr.mxu0 0.0
        %723 = vmatpush1.msra.mxu0 0.0
        %724 = vmatprep.subr.mxu0 0.0
        %725 = vmatpush1.msra.mxu0 0.0
        %726 = vmatprep.subr.mxu0 0.0
        %727 = vmatpush1.msra.mxu0 0.0
        %728 = vmatprep.subr.mxu0 0.0
        %729 = vmatpush1.msra.mxu0 0.0
        %730 = vmatprep.subr.mxu0 0.0
        %731 = vmatpush1.msra.mxu0 0.0
        %732 = vmatprep.subr.mxu0 0.0
        %733 = vmatpush1.msra.mxu0 0.0
        %734 = vmatprep.subr.mxu0 0.0
        %735 = vmatpush1.msra.mxu0 0.0
        %736 = vmatprep.subr.mxu0 0.0
        %737 = vmatpush1.msra.mxu0 0.0
        %738 = vmatprep.subr.mxu0 0.0
        %739 = vmatpush1.msra.mxu0 0.0
        %740 = vmatprep.subr.mxu0 0.0
        %741 = vmatpush1.msra.mxu0 %v703
        %742 = vmatprep.subr.mxu0 0.0
        %743 = vmatpush1.msra.mxu0 %v702
        %744 = vmatprep.subr.mxu0 0.0
        %745 = vmatpush1.msra.mxu0 %v701
        %746 = vmatprep.subr.mxu0 0.0
        %747 = vmatpush1.msra.mxu0 %v700
        %748 = vmatprep.subr.mxu0 0.0
        %749 = vmatpush2.msra.mxu0 0.0
        %750 = vmatprep.subr.mxu0 0.0
        %751 = vmatpush2.msra.mxu0 0.0
        %752 = vmatprep.subr.mxu0 0.0
        %753 = vmatpush2.msra.mxu0 0.0
        %754 = vmatprep.subr.mxu0 0.0
        %755 = vmatpush2.msra.mxu0 0.0
        %756 = vmatprep.subr.mxu0 0.0
        %757 = vmatpush2.msra.mxu0 0.0
        %758 = vmatprep.subr.mxu0 0.0
        %759 = vmatpush2.msra.mxu0 0.0
        %760 = vmatprep.subr.mxu0 0.0
        %761 = vmatpush2.msra.mxu0 0.0
        %762 = vmatprep.subr.mxu0 0.0
        %763 = vmatpush2.msra.mxu0 0.0
        %764 = vmatprep.subr.mxu0 0.0
        %765 = vmatpush2.msra.mxu0 0.0
        %766 = vmatprep.subr.mxu0 0.0
        %767 = vmatpush2.msra.mxu0 0.0
        %768 = vmatprep.subr.mxu0 0.0
        %769 = vmatpush2.msra.mxu0 0.0
        %770 = vmatprep.subr.mxu0 0.0
        %771 = vmatpush2.msra.mxu0 0.0
        %772 = vmatprep.subr.mxu0 0.0
        %773 = vmatpush2.msra.mxu0 0.0
        %774 = vmatprep.subr.mxu0 0.0
        %775 = vmatpush2.msra.mxu0 0.0
        %776 = vmatprep.subr.mxu0 0.0
        %777 = vmatpush2.msra.mxu0 0.0
        %778 = vmatprep.subr.mxu0 0.0
        %779 = vmatpush2.msra.mxu0 0.0
        %780 = vmatprep.mubr.f32.mxu0 0.0
        %781 = vmatmul.mubr.f32.gmra.mxu0 %v714
        %v782 = vpop.f32.mrf.mxu0
        %v783 = vadd.f32 %v710, %v782
        %v784 = vpop.f32.mrf.mxu0
        %785 = vdwg.mxu0
        %s786 = smul.u32 %s697, 8
        %s787 = scalar_lea.vmem [#allocation2], %s786
        %v788 = vld [vmem:[%s787] sm:$0xff]
        %vm789 = vcmask 64512
        %v791 = vsel %vm789, %v783, 0
        %v794 = vsel %vm789, %v788, 0
        %796 = vmatprep.subr.mxu0 0.0
        %797 = vmatpush1.xpose.msra.mxu0 0.0
        %798 = vmatprep.subr.mxu0 0.0
        %799 = vmatpush1.xpose.msra.mxu0 0.0
        %800 = vmatprep.subr.mxu0 0.0
        %801 = vmatpush1.xpose.msra.mxu0 0.0
        %802 = vmatprep.subr.mxu0 0.0
        %803 = vmatpush1.xpose.msra.mxu0 0.0
        %804 = vmatprep.subr.mxu0 0.0
        %805 = vmatpush1.xpose.msra.mxu0 0.0
        %806 = vmatprep.subr.mxu0 0.0
        %807 = vmatpush1.xpose.msra.mxu0 0.0
        %808 = vmatprep.subr.mxu0 0.0
        %809 = vmatpush1.xpose.msra.mxu0 0.0
        %810 = vmatprep.subr.mxu0 0.0
        %811 = vmatpush1.xpose.msra.mxu0 0.0
        %812 = vmatprep.subr.mxu0 0.0
        %813 = vmatpush1.xpose.msra.mxu0 0.0
        %814 = vmatprep.subr.mxu0 0.0
        %815 = vmatpush1.xpose.msra.mxu0 0.0
        %816 = vmatprep.subr.mxu0 0.0
        %817 = vmatpush1.xpose.msra.mxu0 0.0
        %818 = vmatprep.subr.mxu0 0.0
        %819 = vmatpush1.xpose.msra.mxu0 0.0
        %820 = vmatprep.subr.mxu0 0.0
        %821 = vmatpush1.xpose.msra.mxu0 0.0
        %822 = vmatprep.subr.mxu0 0.0
        %823 = vmatpush1.xpose.msra.mxu0 0.0
        %824 = vmatprep.subr.mxu0 0.0
        %825 = vmatpush1.xpose.msra.mxu0 0.0
        %826 = vmatprep.subr.mxu0 0.0
        %827 = vmatpush1.xpose.msra.mxu0 %v794
        %828 = vmatprep.subr.mxu0 0.0
        %829 = vmatpush2.xpose.msra.mxu0 0.0
        %830 = vmatprep.subr.mxu0 0.0
        %831 = vmatpush2.xpose.msra.mxu0 0.0
        %832 = vmatprep.subr.mxu0 0.0
        %833 = vmatpush2.xpose.msra.mxu0 0.0
        %834 = vmatprep.subr.mxu0 0.0
        %835 = vmatpush2.xpose.msra.mxu0 0.0
        %836 = vmatprep.subr.mxu0 0.0
        %837 = vmatpush2.xpose.msra.mxu0 0.0
        %838 = vmatprep.subr.mxu0 0.0
        %839 = vmatpush2.xpose.msra.mxu0 0.0
        %840 = vmatprep.subr.mxu0 0.0
        %841 = vmatpush2.xpose.msra.mxu0 0.0
        %842 = vmatprep.subr.mxu0 0.0
        %843 = vmatpush2.xpose.msra.mxu0 0.0
        %844 = vmatprep.subr.mxu0 0.0
        %845 = vmatpush2.xpose.msra.mxu0 0.0
        %846 = vmatprep.subr.mxu0 0.0
        %847 = vmatpush2.xpose.msra.mxu0 0.0
        %848 = vmatprep.subr.mxu0 0.0
        %849 = vmatpush2.xpose.msra.mxu0 0.0
        %850 = vmatprep.subr.mxu0 0.0
        %851 = vmatpush2.xpose.msra.mxu0 0.0
        %852 = vmatprep.subr.mxu0 0.0
        %853 = vmatpush2.xpose.msra.mxu0 0.0
        %854 = vmatprep.subr.mxu0 0.0
        %855 = vmatpush2.xpose.msra.mxu0 0.0
        %856 = vmatprep.subr.mxu0 0.0
        %857 = vmatpush2.xpose.msra.mxu0 0.0
        %858 = vmatprep.subr.mxu0 0.0
        %859 = vmatpush2.xpose.msra.mxu0 0.0
        %860 = vmatprep.mubr.f32.mxu0 0.0
        %861 = vmatmul.mubr.f32.gmra.mxu0 %v791
        %v862 = vpop.f32.mrf.mxu0
        %v863 = vadd.f32 0.0, %v862
        %v864 = vpop.f32.mrf.mxu0
        %865 = vdwg.mxu0
        %v866 = vsel %vm789, %v863, -inf
        %867 = vmax.xlane.f32.xlu0 %v866
        %v868 = vpop.xlane.xlu0 %867
        %v869 = vsub.f32 %v863, %v868
        %v870 = vmul.f32 %v869, 1.442695
        %v871 = vpow.pop %v870
        %v872 = vsel %vm789, %v871, 0.0
        %873 = vadd.xlane.f32.xlu0 %v872
        %v874 = vpop.xlane.xlu0 %873
        %v875 = vrcp.pop %v874
        %v876 = vmul.f32 %v871, %v875
        %s877 = scalar_lea.vmem [#allocation3], %s786
        %v878 = vld [vmem:[%s877] sm:$0xff]
        %v880 = vsel %vm789, %v876, 0
        %882 = vmatprep.subr.mxu0 0.0
        %883 = vmatpush1.msra.mxu0 0.0
        %884 = vmatprep.subr.mxu0 0.0
        %885 = vmatpush1.msra.mxu0 0.0
        %886 = vmatprep.subr.mxu0 0.0
        %887 = vmatpush1.msra.mxu0 0.0
        %888 = vmatprep.subr.mxu0 0.0
        %889 = vmatpush1.msra.mxu0 0.0
        %890 = vmatprep.subr.mxu0 0.0
        %891 = vmatpush1.msra.mxu0 0.0
        %892 = vmatprep.subr.mxu0 0.0
        %893 = vmatpush1.msra.mxu0 0.0
        %894 = vmatprep.subr.mxu0 0.0
        %895 = vmatpush1.msra.mxu0 0.0
        %896 = vmatprep.subr.mxu0 0.0
        %897 = vmatpush1.msra.mxu0 0.0
        %898 = vmatprep.subr.mxu0 0.0
        %899 = vmatpush1.msra.mxu0 0.0
        %900 = vmatprep.subr.mxu0 0.0
        %901 = vmatpush1.msra.mxu0 0.0
        %902 = vmatprep.subr.mxu0 0.0
        %903 = vmatpush1.msra.mxu0 0.0
        %904 = vmatprep.subr.mxu0 0.0
        %905 = vmatpush1.msra.mxu0 0.0
        %906 = vmatprep.subr.mxu0 0.0
        %907 = vmatpush1.msra.mxu0 0.0
        %908 = vmatprep.subr.mxu0 0.0
        %909 = vmatpush1.msra.mxu0 0.0
        %910 = vmatprep.subr.mxu0 0.0
        %911 = vmatpush1.msra.mxu0 0.0
        %912 = vmatprep.subr.mxu0 0.0
        %913 = vmatpush1.msra.mxu0 %v878
        %914 = vmatprep.subr.mxu0 0.0
        %915 = vmatpush2.msra.mxu0 0.0
        %916 = vmatprep.subr.mxu0 0.0
        %917 = vmatpush2.msra.mxu0 0.0
        %918 = vmatprep.subr.mxu0 0.0
        %919 = vmatpush2.msra.mxu0 0.0
        %920 = vmatprep.subr.mxu0 0.0
        %921 = vmatpush2.msra.mxu0 0.0
        %922 = vmatprep.subr.mxu0 0.0
        %923 = vmatpush2.msra.mxu0 0.0
        %924 = vmatprep.subr.mxu0 0.0
        %925 = vmatpush2.msra.mxu0 0.0
        %926 = vmatprep.subr.mxu0 0.0
        %927 = vmatpush2.msra.mxu0 0.0
        %928 = vmatprep.subr.mxu0 0.0
        %929 = vmatpush2.msra.mxu0 0.0
        %930 = vmatprep.subr.mxu0 0.0
        %931 = vmatpush2.msra.mxu0 0.0
        %932 = vmatprep.subr.mxu0 0.0
        %933 = vmatpush2.msra.mxu0 0.0
        %934 = vmatprep.subr.mxu0 0.0
        %935 = vmatpush2.msra.mxu0 0.0
        %936 = vmatprep.subr.mxu0 0.0
        %937 = vmatpush2.msra.mxu0 0.0
        %938 = vmatprep.subr.mxu0 0.0
        %939 = vmatpush2.msra.mxu0 0.0
        %940 = vmatprep.subr.mxu0 0.0
        %941 = vmatpush2.msra.mxu0 0.0
        %942 = vmatprep.subr.mxu0 0.0
        %943 = vmatpush2.msra.mxu0 0.0
        %944 = vmatprep.subr.mxu0 0.0
        %945 = vmatpush2.msra.mxu0 0.0
        %946 = vmatprep.mubr.f32.mxu0 0.0
        %947 = vmatmul.mubr.f32.gmra.mxu0 %v880
        %v948 = vpop.f32.mrf.mxu0
        %v949 = vadd.f32 0.0, %v948
        %v950 = vpop.f32.mrf.mxu0
        %951 = vdwg.mxu0
        %s952 = sadd.s32 %s697, 1
        %s953 = smul.u32 %s952, 32
        %s954 = scalar_lea.vmem %s1, %s953
        %v955 = vld [vmem:[%s954] sm:$0xff]
        %v956 = vld [vmem:[%s954 + $0x8] sm:$0xff]
        %v957 = vld [vmem:[%s954 + $0x10] sm:$0xff]
        %v958 = vld [vmem:[%s954 + $0x18] sm:$0xff]
        %s959 = scalar_lea.vmem %s2, %s952
        %v960 = vld [vmem:[%s959] sm:$0x1]
        %v962 = vlaneseq
        %v963 = vshrl.u32 %v962, 7
        %v964 = vsub.s32 0, %v963
        %v965 = vrot.slane %v960, %v964
        %967 = vmatprep.subr.mxu0 0.0
        %968 = vmatpush1.msra.mxu0 0.0
        %969 = vmatprep.subr.mxu0 0.0
        %970 = vmatpush1.msra.mxu0 0.0
        %971 = vmatprep.subr.mxu0 0.0
        %972 = vmatpush1.msra.mxu0 0.0
        %973 = vmatprep.subr.mxu0 0.0
        %974 = vmatpush1.msra.mxu0 0.0
        %975 = vmatprep.subr.mxu0 0.0
        %976 = vmatpush1.msra.mxu0 0.0
        %977 = vmatprep.subr.mxu0 0.0
        %978 = vmatpush1.msra.mxu0 0.0
        %979 = vmatprep.subr.mxu0 0.0
        %980 = vmatpush1.msra.mxu0 0.0
        %981 = vmatprep.subr.mxu0 0.0
        %982 = vmatpush1.msra.mxu0 0.0
        %983 = vmatprep.subr.mxu0 0.0
        %984 = vmatpush1.msra.mxu0 0.0
        %985 = vmatprep.subr.mxu0 0.0
        %986 = vmatpush1.msra.mxu0 0.0
        %987 = vmatprep.subr.mxu0 0.0
        %988 = vmatpush1.msra.mxu0 0.0
        %989 = vmatprep.subr.mxu0 0.0
        %990 = vmatpush1.msra.mxu0 0.0
        %991 = vmatprep.subr.mxu0 0.0
        %992 = vmatpush1.msra.mxu0 %v958
        %993 = vmatprep.subr.mxu0 0.0
        %994 = vmatpush1.msra.mxu0 %v957
        %995 = vmatprep.subr.mxu0 0.0
        %996 = vmatpush1.msra.mxu0 %v956
        %997 = vmatprep.subr.mxu0 0.0
        %998 = vmatpush1.msra.mxu0 %v955
        %999 = vmatprep.subr.mxu0 0.0
        %1000 = vmatpush2.msra.mxu0 0.0
        %1001 = vmatprep.subr.mxu0 0.0
        %1002 = vmatpush2.msra.mxu0 0.0
        %1003 = vmatprep.subr.mxu0 0.0
        %1004 = vmatpush2.msra.mxu0 0.0
        %1005 = vmatprep.subr.mxu0 0.0
        %1006 = vmatpush2.msra.mxu0 0.0
        %1007 = vmatprep.subr.mxu0 0.0
        %1008 = vmatpush2.msra.mxu0 0.0
        %1009 = vmatprep.subr.mxu0 0.0
        %1010 = vmatpush2.msra.mxu0 0.0
        %1011 = vmatprep.subr.mxu0 0.0
        %1012 = vmatpush2.msra.mxu0 0.0
        %1013 = vmatprep.subr.mxu0 0.0
        %1014 = vmatpush2.msra.mxu0 0.0
        %1015 = vmatprep.subr.mxu0 0.0
        %1016 = vmatpush2.msra.mxu0 0.0
        %1017 = vmatprep.subr.mxu0 0.0
        %1018 = vmatpush2.msra.mxu0 0.0
        %1019 = vmatprep.subr.mxu0 0.0
        %1020 = vmatpush2.msra.mxu0 0.0
        %1021 = vmatprep.subr.mxu0 0.0
        %1022 = vmatpush2.msra.mxu0 0.0
        %1023 = vmatprep.subr.mxu0 0.0
        %1024 = vmatpush2.msra.mxu0 0.0
        %1025 = vmatprep.subr.mxu0 0.0
        %1026 = vmatpush2.msra.mxu0 0.0
        %1027 = vmatprep.subr.mxu0 0.0
        %1028 = vmatpush2.msra.mxu0 0.0
        %1029 = vmatprep.subr.mxu0 0.0
        %1030 = vmatpush2.msra.mxu0 0.0
        %1031 = vmatprep.mubr.f32.mxu0 0.0
        %1032 = vmatmul.mubr.f32.gmra.mxu0 %v714
        %v1033 = vpop.f32.mrf.mxu0
        %v1034 = vadd.f32 %v965, %v1033
        %v1035 = vpop.f32.mrf.mxu0
        %1036 = vdwg.mxu0
        %s1037 = smul.u32 %s952, 8
        %s1038 = scalar_lea.vmem [#allocation2], %s1037
        %v1039 = vld [vmem:[%s1038] sm:$0xff]
        %v1041 = vsel %vm789, %v1034, 0
        %v1044 = vsel %vm789, %v1039, 0
        %1046 = vmatprep.subr.mxu0 0.0
        %1047 = vmatpush1.xpose.msra.mxu0 0.0
        %1048 = vmatprep.subr.mxu0 0.0
        %1049 = vmatpush1.xpose.msra.mxu0 0.0
        %1050 = vmatprep.subr.mxu0 0.0
        %1051 = vmatpush1.xpose.msra.mxu0 0.0
        %1052 = vmatprep.subr.mxu0 0.0
        %1053 = vmatpush1.xpose.msra.mxu0 0.0
        %1054 = vmatprep.subr.mxu0 0.0
        %1055 = vmatpush1.xpose.msra.mxu0 0.0
        %1056 = vmatprep.subr.mxu0 0.0
        %1057 = vmatpush1.xpose.msra.mxu0 0.0
        %1058 = vmatprep.subr.mxu0 0.0
        %1059 = vmatpush1.xpose.msra.mxu0 0.0
        %1060 = vmatprep.subr.mxu0 0.0
        %1061 = vmatpush1.xpose.msra.mxu0 0.0
        %1062 = vmatprep.subr.mxu0 0.0
        %1063 = vmatpush1.xpose.msra.mxu0 0.0
        %1064 = vmatprep.subr.mxu0 0.0
        %1065 = vmatpush1.xpose.msra.mxu0 0.0
        %1066 = vmatprep.subr.mxu0 0.0
        %1067 = vmatpush1.xpose.msra.mxu0 0.0
        %1068 = vmatprep.subr.mxu0 0.0
        %1069 = vmatpush1.xpose.msra.mxu0 0.0
        %1070 = vmatprep.subr.mxu0 0.0
        %1071 = vmatpush1.xpose.msra.mxu0 0.0
        %1072 = vmatprep.subr.mxu0 0.0
        %1073 = vmatpush1.xpose.msra.mxu0 0.0
        %1074 = vmatprep.subr.mxu0 0.0
        %1075 = vmatpush1.xpose.msra.mxu0 0.0
        %1076 = vmatprep.subr.mxu0 0.0
        %1077 = vmatpush1.xpose.msra.mxu0 %v1044
        %1078 = vmatprep.subr.mxu0 0.0
        %1079 = vmatpush2.xpose.msra.mxu0 0.0
        %1080 = vmatprep.subr.mxu0 0.0
        %1081 = vmatpush2.xpose.msra.mxu0 0.0
        %1082 = vmatprep.subr.mxu0 0.0
        %1083 = vmatpush2.xpose.msra.mxu0 0.0
        %1084 = vmatprep.subr.mxu0 0.0
        %1085 = vmatpush2.xpose.msra.mxu0 0.0
        %1086 = vmatprep.subr.mxu0 0.0
        %1087 = vmatpush2.xpose.msra.mxu0 0.0
        %1088 = vmatprep.subr.mxu0 0.0
        %1089 = vmatpush2.xpose.msra.mxu0 0.0
        %1090 = vmatprep.subr.mxu0 0.0
        %1091 = vmatpush2.xpose.msra.mxu0 0.0
        %1092 = vmatprep.subr.mxu0 0.0
        %1093 = vmatpush2.xpose.msra.mxu0 0.0
        %1094 = vmatprep.subr.mxu0 0.0
        %1095 = vmatpush2.xpose.msra.mxu0 0.0
        %1096 = vmatprep.subr.mxu0 0.0
        %1097 = vmatpush2.xpose.msra.mxu0 0.0
        %1098 = vmatprep.subr.mxu0 0.0
        %1099 = vmatpush2.xpose.msra.mxu0 0.0
        %1100 = vmatprep.subr.mxu0 0.0
        %1101 = vmatpush2.xpose.msra.mxu0 0.0
        %1102 = vmatprep.subr.mxu0 0.0
        %1103 = vmatpush2.xpose.msra.mxu0 0.0
        %1104 = vmatprep.subr.mxu0 0.0
        %1105 = vmatpush2.xpose.msra.mxu0 0.0
        %1106 = vmatprep.subr.mxu0 0.0
        %1107 = vmatpush2.xpose.msra.mxu0 0.0
        %1108 = vmatprep.subr.mxu0 0.0
        %1109 = vmatpush2.xpose.msra.mxu0 0.0
        %1110 = vmatprep.mubr.f32.mxu0 0.0
        %1111 = vmatmul.mubr.f32.gmra.mxu0 %v1041
        %v1112 = vpop.f32.mrf.mxu0
        %v1113 = vadd.f32 0.0, %v1112
        %v1114 = vpop.f32.mrf.mxu0
        %1115 = vdwg.mxu0
        %v1116 = vsel %vm789, %v1113, -inf
        %1117 = vmax.xlane.f32.xlu0 %v1116
        %v1118 = vpop.xlane.xlu0 %1117
        %v1119 = vsub.f32 %v1113, %v1118
        %v1120 = vmul.f32 %v1119, 1.442695
        %v1121 = vpow.pop %v1120
        %v1122 = vsel %vm789, %v1121, 0.0
        %1123 = vadd.xlane.f32.xlu0 %v1122
        %v1124 = vpop.xlane.xlu0 %1123
        %v1125 = vrcp.pop %v1124
        %v1126 = vmul.f32 %v1121, %v1125
        %s1127 = scalar_lea.vmem [#allocation3], %s1037
        %v1128 = vld [vmem:[%s1127] sm:$0xff]
        %v1130 = vsel %vm789, %v1126, 0
        %1132 = vmatprep.subr.mxu0 0.0
        %1133 = vmatpush1.msra.mxu0 0.0
        %1134 = vmatprep.subr.mxu0 0.0
        %1135 = vmatpush1.msra.mxu0 0.0
        %1136 = vmatprep.subr.mxu0 0.0
        %1137 = vmatpush1.msra.mxu0 0.0
        %1138 = vmatprep.subr.mxu0 0.0
        %1139 = vmatpush1.msra.mxu0 0.0
        %1140 = vmatprep.subr.mxu0 0.0
        %1141 = vmatpush1.msra.mxu0 0.0
        %1142 = vmatprep.subr.mxu0 0.0
        %1143 = vmatpush1.msra.mxu0 0.0
        %1144 = vmatprep.subr.mxu0 0.0
        %1145 = vmatpush1.msra.mxu0 0.0
        %1146 = vmatprep.subr.mxu0 0.0
        %1147 = vmatpush1.msra.mxu0 0.0
        %1148 = vmatprep.subr.mxu0 0.0
        %1149 = vmatpush1.msra.mxu0 0.0
        %1150 = vmatprep.subr.mxu0 0.0
        %1151 = vmatpush1.msra.mxu0 0.0
        %1152 = vmatprep.subr.mxu0 0.0
        %1153 = vmatpush1.msra.mxu0 0.0
        %1154 = vmatprep.subr.mxu0 0.0
        %1155 = vmatpush1.msra.mxu0 0.0
        %1156 = vmatprep.subr.mxu0 0.0
        %1157 = vmatpush1.msra.mxu0 0.0
        %1158 = vmatprep.subr.mxu0 0.0
        %1159 = vmatpush1.msra.mxu0 0.0
        %1160 = vmatprep.subr.mxu0 0.0
        %1161 = vmatpush1.msra.mxu0 0.0
        %1162 = vmatprep.subr.mxu0 0.0
        %1163 = vmatpush1.msra.mxu0 %v1128
        %1164 = vmatprep.subr.mxu0 0.0
        %1165 = vmatpush2.msra.mxu0 0.0
        %1166 = vmatprep.subr.mxu0 0.0
        %1167 = vmatpush2.msra.mxu0 0.0
        %1168 = vmatprep.subr.mxu0 0.0
        %1169 = vmatpush2.msra.mxu0 0.0
        %1170 = vmatprep.subr.mxu0 0.0
        %1171 = vmatpush2.msra.mxu0 0.0
        %1172 = vmatprep.subr.mxu0 0.0
        %1173 = vmatpush2.msra.mxu0 0.0
        %1174 = vmatprep.subr.mxu0 0.0
        %1175 = vmatpush2.msra.mxu0 0.0
        %1176 = vmatprep.subr.mxu0 0.0
        %1177 = vmatpush2.msra.mxu0 0.0
        %1178 = vmatprep.subr.mxu0 0.0
        %1179 = vmatpush2.msra.mxu0 0.0
        %1180 = vmatprep.subr.mxu0 0.0
        %1181 = vmatpush2.msra.mxu0 0.0
        %1182 = vmatprep.subr.mxu0 0.0
        %1183 = vmatpush2.msra.mxu0 0.0
        %1184 = vmatprep.subr.mxu0 0.0
        %1185 = vmatpush2.msra.mxu0 0.0
        %1186 = vmatprep.subr.mxu0 0.0
        %1187 = vmatpush2.msra.mxu0 0.0
        %1188 = vmatprep.subr.mxu0 0.0
        %1189 = vmatpush2.msra.mxu0 0.0
        %1190 = vmatprep.subr.mxu0 0.0
        %1191 = vmatpush2.msra.mxu0 0.0
        %1192 = vmatprep.subr.mxu0 0.0
        %1193 = vmatpush2.msra.mxu0 0.0
        %1194 = vmatprep.subr.mxu0 0.0
        %1195 = vmatpush2.msra.mxu0 0.0
        %1196 = vmatprep.mubr.f32.mxu0 0.0
        %1197 = vmatmul.mubr.f32.gmra.mxu0 %v1130
        %v1198 = vpop.f32.mrf.mxu0
        %v1199 = vadd.f32 0.0, %v1198
        %v1200 = vpop.f32.mrf.mxu0
        %1201 = vdwg.mxu0
        %s1202 = sadd.s32 %s697, 2
        %s1203 = smul.u32 %s1202, 32
        %s1204 = scalar_lea.vmem %s1, %s1203
        %v1205 = vld [vmem:[%s1204] sm:$0xff]
        %v1206 = vld [vmem:[%s1204 + $0x8] sm:$0xff]
        %v1207 = vld [vmem:[%s1204 + $0x10] sm:$0xff]
        %v1208 = vld [vmem:[%s1204 + $0x18] sm:$0xff]
        %s1209 = scalar_lea.vmem %s2, %s1202
        %v1210 = vld [vmem:[%s1209] sm:$0x1]
        %v1212 = vlaneseq
        %v1213 = vshrl.u32 %v1212, 7
        %v1214 = vsub.s32 0, %v1213
        %v1215 = vrot.slane %v1210, %v1214
        %1217 = vmatprep.subr.mxu0 0.0
        %1218 = vmatpush1.msra.mxu0 0.0
        %1219 = vmatprep.subr.mxu0 0.0
        %1220 = vmatpush1.msra.mxu0 0.0
        %1221 = vmatprep.subr.mxu0 0.0
        %1222 = vmatpush1.msra.mxu0 0.0
        %1223 = vmatprep.subr.mxu0 0.0
        %1224 = vmatpush1.msra.mxu0 0.0
        %1225 = vmatprep.subr.mxu0 0.0
        %1226 = vmatpush1.msra.mxu0 0.0
        %1227 = vmatprep.subr.mxu0 0.0
        %1228 = vmatpush1.msra.mxu0 0.0
        %1229 = vmatprep.subr.mxu0 0.0
        %1230 = vmatpush1.msra.mxu0 0.0
        %1231 = vmatprep.subr.mxu0 0.0
        %1232 = vmatpush1.msra.mxu0 0.0
        %1233 = vmatprep.subr.mxu0 0.0
        %1234 = vmatpush1.msra.mxu0 0.0
        %1235 = vmatprep.subr.mxu0 0.0
        %1236 = vmatpush1.msra.mxu0 0.0
        %1237 = vmatprep.subr.mxu0 0.0
        %1238 = vmatpush1.msra.mxu0 0.0
        %1239 = vmatprep.subr.mxu0 0.0
        %1240 = vmatpush1.msra.mxu0 0.0
        %1241 = vmatprep.subr.mxu0 0.0
        %1242 = vmatpush1.msra.mxu0 %v1208
        %1243 = vmatprep.subr.mxu0 0.0
        %1244 = vmatpush1.msra.mxu0 %v1207
        %1245 = vmatprep.subr.mxu0 0.0
        %1246 = vmatpush1.msra.mxu0 %v1206
        %1247 = vmatprep.subr.mxu0 0.0
        %1248 = vmatpush1.msra.mxu0 %v1205
        %1249 = vmatprep.subr.mxu0 0.0
        %1250 = vmatpush2.msra.mxu0 0.0
        %1251 = vmatprep.subr.mxu0 0.0
        %1252 = vmatpush2.msra.mxu0 0.0
        %1253 = vmatprep.subr.mxu0 0.0
        %1254 = vmatpush2.msra.mxu0 0.0
        %1255 = vmatprep.subr.mxu0 0.0
        %1256 = vmatpush2.msra.mxu0 0.0
        %1257 = vmatprep.subr.mxu0 0.0
        %1258 = vmatpush2.msra.mxu0 0.0
        %1259 = vmatprep.subr.mxu0 0.0
        %1260 = vmatpush2.msra.mxu0 0.0
        %1261 = vmatprep.subr.mxu0 0.0
        %1262 = vmatpush2.msra.mxu0 0.0
        %1263 = vmatprep.subr.mxu0 0.0
        %1264 = vmatpush2.msra.mxu0 0.0
        %1265 = vmatprep.subr.mxu0 0.0
        %1266 = vmatpush2.msra.mxu0 0.0
        %1267 = vmatprep.subr.mxu0 0.0
        %1268 = vmatpush2.msra.mxu0 0.0
        %1269 = vmatprep.subr.mxu0 0.0
        %1270 = vmatpush2.msra.mxu0 0.0
        %1271 = vmatprep.subr.mxu0 0.0
        %1272 = vmatpush2.msra.mxu0 0.0
        %1273 = vmatprep.subr.mxu0 0.0
        %1274 = vmatpush2.msra.mxu0 0.0
        %1275 = vmatprep.subr.mxu0 0.0
        %1276 = vmatpush2.msra.mxu0 0.0
        %1277 = vmatprep.subr.mxu0 0.0
        %1278 = vmatpush2.msra.mxu0 0.0
        %1279 = vmatprep.subr.mxu0 0.0
        %1280 = vmatpush2.msra.mxu0 0.0
        %1281 = vmatprep.mubr.f32.mxu0 0.0
        %1282 = vmatmul.mubr.f32.gmra.mxu0 %v714
        %v1283 = vpop.f32.mrf.mxu0
        %v1284 = vadd.f32 %v1215, %v1283
        %v1285 = vpop.f32.mrf.mxu0
        %1286 = vdwg.mxu0
        %s1287 = smul.u32 %s1202, 8
        %s1288 = scalar_lea.vmem [#allocation2], %s1287
        %v1289 = vld [vmem:[%s1288] sm:$0xff]
        %v1291 = vsel %vm789, %v1284, 0
        %v1294 = vsel %vm789, %v1289, 0
        %1296 = vmatprep.subr.mxu0 0.0
        %1297 = vmatpush1.xpose.msra.mxu0 0.0
        %1298 = vmatprep.subr.mxu0 0.0
        %1299 = vmatpush1.xpose.msra.mxu0 0.0
        %1300 = vmatprep.subr.mxu0 0.0
        %1301 = vmatpush1.xpose.msra.mxu0 0.0
        %1302 = vmatprep.subr.mxu0 0.0
        %1303 = vmatpush1.xpose.msra.mxu0 0.0
        %1304 = vmatprep.subr.mxu0 0.0
        %1305 = vmatpush1.xpose.msra.mxu0 0.0
        %1306 = vmatprep.subr.mxu0 0.0
        %1307 = vmatpush1.xpose.msra.mxu0 0.0
        %1308 = vmatprep.subr.mxu0 0.0
        %1309 = vmatpush1.xpose.msra.mxu0 0.0
        %1310 = vmatprep.subr.mxu0 0.0
        %1311 = vmatpush1.xpose.msra.mxu0 0.0
        %1312 = vmatprep.subr.mxu0 0.0
        %1313 = vmatpush1.xpose.msra.mxu0 0.0
        %1314 = vmatprep.subr.mxu0 0.0
        %1315 = vmatpush1.xpose.msra.mxu0 0.0
        %1316 = vmatprep.subr.mxu0 0.0
        %1317 = vmatpush1.xpose.msra.mxu0 0.0
        %1318 = vmatprep.subr.mxu0 0.0
        %1319 = vmatpush1.xpose.msra.mxu0 0.0
        %1320 = vmatprep.subr.mxu0 0.0
        %1321 = vmatpush1.xpose.msra.mxu0 0.0
        %1322 = vmatprep.subr.mxu0 0.0
        %1323 = vmatpush1.xpose.msra.mxu0 0.0
        %1324 = vmatprep.subr.mxu0 0.0
        %1325 = vmatpush1.xpose.msra.mxu0 0.0
        %1326 = vmatprep.subr.mxu0 0.0
        %1327 = vmatpush1.xpose.msra.mxu0 %v1294
        %1328 = vmatprep.subr.mxu0 0.0
        %1329 = vmatpush2.xpose.msra.mxu0 0.0
        %1330 = vmatprep.subr.mxu0 0.0
        %1331 = vmatpush2.xpose.msra.mxu0 0.0
        %1332 = vmatprep.subr.mxu0 0.0
        %1333 = vmatpush2.xpose.msra.mxu0 0.0
        %1334 = vmatprep.subr.mxu0 0.0
        %1335 = vmatpush2.xpose.msra.mxu0 0.0
        %1336 = vmatprep.subr.mxu0 0.0
        %1337 = vmatpush2.xpose.msra.mxu0 0.0
        %1338 = vmatprep.subr.mxu0 0.0
        %1339 = vmatpush2.xpose.msra.mxu0 0.0
        %1340 = vmatprep.subr.mxu0 0.0
        %1341 = vmatpush2.xpose.msra.mxu0 0.0
        %1342 = vmatprep.subr.mxu0 0.0
        %1343 = vmatpush2.xpose.msra.mxu0 0.0
        %1344 = vmatprep.subr.mxu0 0.0
        %1345 = vmatpush2.xpose.msra.mxu0 0.0
        %1346 = vmatprep.subr.mxu0 0.0
        %1347 = vmatpush2.xpose.msra.mxu0 0.0
        %1348 = vmatprep.subr.mxu0 0.0
        %1349 = vmatpush2.xpose.msra.mxu0 0.0
        %1350 = vmatprep.subr.mxu0 0.0
        %1351 = vmatpush2.xpose.msra.mxu0 0.0
        %1352 = vmatprep.subr.mxu0 0.0
        %1353 = vmatpush2.xpose.msra.mxu0 0.0
        %1354 = vmatprep.subr.mxu0 0.0
        %1355 = vmatpush2.xpose.msra.mxu0 0.0
        %1356 = vmatprep.subr.mxu0 0.0
        %1357 = vmatpush2.xpose.msra.mxu0 0.0
        %1358 = vmatprep.subr.mxu0 0.0
        %1359 = vmatpush2.xpose.msra.mxu0 0.0
        %1360 = vmatprep.mubr.f32.mxu0 0.0
        %1361 = vmatmul.mubr.f32.gmra.mxu0 %v1291
        %v1362 = vpop.f32.mrf.mxu0
        %v1363 = vadd.f32 0.0, %v1362
        %v1364 = vpop.f32.mrf.mxu0
        %1365 = vdwg.mxu0
        %v1366 = vsel %vm789, %v1363, -inf
        %1367 = vmax.xlane.f32.xlu0 %v1366
        %v1368 = vpop.xlane.xlu0 %1367
        %v1369 = vsub.f32 %v1363, %v1368
        %v1370 = vmul.f32 %v1369, 1.442695
        %v1371 = vpow.pop %v1370
        %v1372 = vsel %vm789, %v1371, 0.0
        %1373 = vadd.xlane.f32.xlu0 %v1372
        %v1374 = vpop.xlane.xlu0 %1373
        %v1375 = vrcp.pop %v1374
        %v1376 = vmul.f32 %v1371, %v1375
        %s1377 = scalar_lea.vmem [#allocation3], %s1287
        %v1378 = vld [vmem:[%s1377] sm:$0xff]
        %v1380 = vsel %vm789, %v1376, 0
        %1382 = vmatprep.subr.mxu0 0.0
        %1383 = vmatpush1.msra.mxu0 0.0
        %1384 = vmatprep.subr.mxu0 0.0
        %1385 = vmatpush1.msra.mxu0 0.0
        %1386 = vmatprep.subr.mxu0 0.0
        %1387 = vmatpush1.msra.mxu0 0.0
        %1388 = vmatprep.subr.mxu0 0.0
        %1389 = vmatpush1.msra.mxu0 0.0
        %1390 = vmatprep.subr.mxu0 0.0
        %1391 = vmatpush1.msra.mxu0 0.0
        %1392 = vmatprep.subr.mxu0 0.0
        %1393 = vmatpush1.msra.mxu0 0.0
        %1394 = vmatprep.subr.mxu0 0.0
        %1395 = vmatpush1.msra.mxu0 0.0
        %1396 = vmatprep.subr.mxu0 0.0
        %1397 = vmatpush1.msra.mxu0 0.0
        %1398 = vmatprep.subr.mxu0 0.0
        %1399 = vmatpush1.msra.mxu0 0.0
        %1400 = vmatprep.subr.mxu0 0.0
        %1401 = vmatpush1.msra.mxu0 0.0
        %1402 = vmatprep.subr.mxu0 0.0
        %1403 = vmatpush1.msra.mxu0 0.0
        %1404 = vmatprep.subr.mxu0 0.0
        %1405 = vmatpush1.msra.mxu0 0.0
        %1406 = vmatprep.subr.mxu0 0.0
        %1407 = vmatpush1.msra.mxu0 0.0
        %1408 = vmatprep.subr.mxu0 0.0
        %1409 = vmatpush1.msra.mxu0 0.0
        %1410 = vmatprep.subr.mxu0 0.0
        %1411 = vmatpush1.msra.mxu0 0.0
        %1412 = vmatprep.subr.mxu0 0.0
        %1413 = vmatpush1.msra.mxu0 %v1378
        %1414 = vmatprep.subr.mxu0 0.0
        %1415 = vmatpush2.msra.mxu0 0.0
        %1416 = vmatprep.subr.mxu0 0.0
        %1417 = vmatpush2.msra.mxu0 0.0
        %1418 = vmatprep.subr.mxu0 0.0
        %1419 = vmatpush2.msra.mxu0 0.0
        %1420 = vmatprep.subr.mxu0 0.0
        %1421 = vmatpush2.msra.mxu0 0.0
        %1422 = vmatprep.subr.mxu0 0.0
        %1423 = vmatpush2.msra.mxu0 0.0
        %1424 = vmatprep.subr.mxu0 0.0
        %1425 = vmatpush2.msra.mxu0 0.0
        %1426 = vmatprep.subr.mxu0 0.0
        %1427 = vmatpush2.msra.mxu0 0.0
        %1428 = vmatprep.subr.mxu0 0.0
        %1429 = vmatpush2.msra.mxu0 0.0
        %1430 = vmatprep.subr.mxu0 0.0
        %1431 = vmatpush2.msra.mxu0 0.0
        %1432 = vmatprep.subr.mxu0 0.0
        %1433 = vmatpush2.msra.mxu0 0.0
        %1434 = vmatprep.subr.mxu0 0.0
        %1435 = vmatpush2.msra.mxu0 0.0
        %1436 = vmatprep.subr.mxu0 0.0
        %1437 = vmatpush2.msra.mxu0 0.0
        %1438 = vmatprep.subr.mxu0 0.0
        %1439 = vmatpush2.msra.mxu0 0.0
        %1440 = vmatprep.subr.mxu0 0.0
        %1441 = vmatpush2.msra.mxu0 0.0
        %1442 = vmatprep.subr.mxu0 0.0
        %1443 = vmatpush2.msra.mxu0 0.0
        %1444 = vmatprep.subr.mxu0 0.0
        %1445 = vmatpush2.msra.mxu0 0.0
        %1446 = vmatprep.mubr.f32.mxu0 0.0
        %1447 = vmatmul.mubr.f32.gmra.mxu0 %v1380
        %v1448 = vpop.f32.mrf.mxu0
        %v1449 = vadd.f32 0.0, %v1448
        %v1450 = vpop.f32.mrf.mxu0
        %1451 = vdwg.mxu0
        %s1452 = sadd.s32 %s697, 3
        %s1453 = smul.u32 %s1452, 32
        %s1454 = scalar_lea.vmem %s1, %s1453
        %v1455 = vld [vmem:[%s1454] sm:$0xff]
        %v1456 = vld [vmem:[%s1454 + $0x8] sm:$0xff]
        %v1457 = vld [vmem:[%s1454 + $0x10] sm:$0xff]
        %v1458 = vld [vmem:[%s1454 + $0x18] sm:$0xff]
        %s1459 = scalar_lea.vmem %s2, %s1452
        %v1460 = vld [vmem:[%s1459] sm:$0x1]
        %v1462 = vlaneseq
        %v1463 = vshrl.u32 %v1462, 7
        %v1464 = vsub.s32 0, %v1463
        %v1465 = vrot.slane %v1460, %v1464
        %1467 = vmatprep.subr.mxu0 0.0
        %1468 = vmatpush1.msra.mxu0 0.0
        %1469 = vmatprep.subr.mxu0 0.0
        %1470 = vmatpush1.msra.mxu0 0.0
        %1471 = vmatprep.subr.mxu0 0.0
        %1472 = vmatpush1.msra.mxu0 0.0
        %1473 = vmatprep.subr.mxu0 0.0
        %1474 = vmatpush1.msra.mxu0 0.0
        %1475 = vmatprep.subr.mxu0 0.0
        %1476 = vmatpush1.msra.mxu0 0.0
        %1477 = vmatprep.subr.mxu0 0.0
        %1478 = vmatpush1.msra.mxu0 0.0
        %1479 = vmatprep.subr.mxu0 0.0
        %1480 = vmatpush1.msra.mxu0 0.0
        %1481 = vmatprep.subr.mxu0 0.0
        %1482 = vmatpush1.msra.mxu0 0.0
        %1483 = vmatprep.subr.mxu0 0.0
        %1484 = vmatpush1.msra.mxu0 0.0
        %1485 = vmatprep.subr.mxu0 0.0
        %1486 = vmatpush1.msra.mxu0 0.0
        %1487 = vmatprep.subr.mxu0 0.0
        %1488 = vmatpush1.msra.mxu0 0.0
        %1489 = vmatprep.subr.mxu0 0.0
        %1490 = vmatpush1.msra.mxu0 0.0
        %1491 = vmatprep.subr.mxu0 0.0
        %1492 = vmatpush1.msra.mxu0 %v1458
        %1493 = vmatprep.subr.mxu0 0.0
        %1494 = vmatpush1.msra.mxu0 %v1457
        %1495 = vmatprep.subr.mxu0 0.0
        %1496 = vmatpush1.msra.mxu0 %v1456
        %1497 = vmatprep.subr.mxu0 0.0
        %1498 = vmatpush1.msra.mxu0 %v1455
        %1499 = vmatprep.subr.mxu0 0.0
        %1500 = vmatpush2.msra.mxu0 0.0
        %1501 = vmatprep.subr.mxu0 0.0
        %1502 = vmatpush2.msra.mxu0 0.0
        %1503 = vmatprep.subr.mxu0 0.0
        %1504 = vmatpush2.msra.mxu0 0.0
        %1505 = vmatprep.subr.mxu0 0.0
        %1506 = vmatpush2.msra.mxu0 0.0
        %1507 = vmatprep.subr.mxu0 0.0
        %1508 = vmatpush2.msra.mxu0 0.0
        %1509 = vmatprep.subr.mxu0 0.0
        %1510 = vmatpush2.msra.mxu0 0.0
        %1511 = vmatprep.subr.mxu0 0.0
        %1512 = vmatpush2.msra.mxu0 0.0
        %1513 = vmatprep.subr.mxu0 0.0
        %1514 = vmatpush2.msra.mxu0 0.0
        %1515 = vmatprep.subr.mxu0 0.0
        %1516 = vmatpush2.msra.mxu0 0.0
        %1517 = vmatprep.subr.mxu0 0.0
        %1518 = vmatpush2.msra.mxu0 0.0
        %1519 = vmatprep.subr.mxu0 0.0
        %1520 = vmatpush2.msra.mxu0 0.0
        %1521 = vmatprep.subr.mxu0 0.0
        %1522 = vmatpush2.msra.mxu0 0.0
        %1523 = vmatprep.subr.mxu0 0.0
        %1524 = vmatpush2.msra.mxu0 0.0
        %1525 = vmatprep.subr.mxu0 0.0
        %1526 = vmatpush2.msra.mxu0 0.0
        %1527 = vmatprep.subr.mxu0 0.0
        %1528 = vmatpush2.msra.mxu0 0.0
        %1529 = vmatprep.subr.mxu0 0.0
        %1530 = vmatpush2.msra.mxu0 0.0
        %1531 = vmatprep.mubr.f32.mxu0 0.0
        %1532 = vmatmul.mubr.f32.gmra.mxu0 %v714
        %v1533 = vpop.f32.mrf.mxu0
        %v1534 = vadd.f32 %v1465, %v1533
        %v1535 = vpop.f32.mrf.mxu0
        %1536 = vdwg.mxu0
        %s1537 = smul.u32 %s1452, 8
        %s1538 = scalar_lea.vmem [#allocation2], %s1537
        %v1539 = vld [vmem:[%s1538] sm:$0xff]
        %v1541 = vsel %vm789, %v1534, 0
        %v1544 = vsel %vm789, %v1539, 0
        %1546 = vmatprep.subr.mxu0 0.0
        %1547 = vmatpush1.xpose.msra.mxu0 0.0
        %1548 = vmatprep.subr.mxu0 0.0
        %1549 = vmatpush1.xpose.msra.mxu0 0.0
        %1550 = vmatprep.subr.mxu0 0.0
        %1551 = vmatpush1.xpose.msra.mxu0 0.0
        %1552 = vmatprep.subr.mxu0 0.0
        %1553 = vmatpush1.xpose.msra.mxu0 0.0
        %1554 = vmatprep.subr.mxu0 0.0
        %1555 = vmatpush1.xpose.msra.mxu0 0.0
        %1556 = vmatprep.subr.mxu0 0.0
        %1557 = vmatpush1.xpose.msra.mxu0 0.0
        %1558 = vmatprep.subr.mxu0 0.0
        %1559 = vmatpush1.xpose.msra.mxu0 0.0
        %1560 = vmatprep.subr.mxu0 0.0
        %1561 = vmatpush1.xpose.msra.mxu0 0.0
        %1562 = vmatprep.subr.mxu0 0.0
        %1563 = vmatpush1.xpose.msra.mxu0 0.0
        %1564 = vmatprep.subr.mxu0 0.0
        %1565 = vmatpush1.xpose.msra.mxu0 0.0
        %1566 = vmatprep.subr.mxu0 0.0
        %1567 = vmatpush1.xpose.msra.mxu0 0.0
        %1568 = vmatprep.subr.mxu0 0.0
        %1569 = vmatpush1.xpose.msra.mxu0 0.0
        %1570 = vmatprep.subr.mxu0 0.0
        %1571 = vmatpush1.xpose.msra.mxu0 0.0
        %1572 = vmatprep.subr.mxu0 0.0
        %1573 = vmatpush1.xpose.msra.mxu0 0.0
        %1574 = vmatprep.subr.mxu0 0.0
        %1575 = vmatpush1.xpose.msra.mxu0 0.0
        %1576 = vmatprep.subr.mxu0 0.0
        %1577 = vmatpush1.xpose.msra.mxu0 %v1544
        %1578 = vmatprep.subr.mxu0 0.0
        %1579 = vmatpush2.xpose.msra.mxu0 0.0
        %1580 = vmatprep.subr.mxu0 0.0
        %1581 = vmatpush2.xpose.msra.mxu0 0.0
        %1582 = vmatprep.subr.mxu0 0.0
        %1583 = vmatpush2.xpose.msra.mxu0 0.0
        %1584 = vmatprep.subr.mxu0 0.0
        %1585 = vmatpush2.xpose.msra.mxu0 0.0
        %1586 = vmatprep.subr.mxu0 0.0
        %1587 = vmatpush2.xpose.msra.mxu0 0.0
        %1588 = vmatprep.subr.mxu0 0.0
        %1589 = vmatpush2.xpose.msra.mxu0 0.0
        %1590 = vmatprep.subr.mxu0 0.0
        %1591 = vmatpush2.xpose.msra.mxu0 0.0
        %1592 = vmatprep.subr.mxu0 0.0
        %1593 = vmatpush2.xpose.msra.mxu0 0.0
        %1594 = vmatprep.subr.mxu0 0.0
        %1595 = vmatpush2.xpose.msra.mxu0 0.0
        %1596 = vmatprep.subr.mxu0 0.0
        %1597 = vmatpush2.xpose.msra.mxu0 0.0
        %1598 = vmatprep.subr.mxu0 0.0
        %1599 = vmatpush2.xpose.msra.mxu0 0.0
        %1600 = vmatprep.subr.mxu0 0.0
        %1601 = vmatpush2.xpose.msra.mxu0 0.0
        %1602 = vmatprep.subr.mxu0 0.0
        %1603 = vmatpush2.xpose.msra.mxu0 0.0
        %1604 = vmatprep.subr.mxu0 0.0
        %1605 = vmatpush2.xpose.msra.mxu0 0.0
        %1606 = vmatprep.subr.mxu0 0.0
        %1607 = vmatpush2.xpose.msra.mxu0 0.0
        %1608 = vmatprep.subr.mxu0 0.0
        %1609 = vmatpush2.xpose.msra.mxu0 0.0
        %1610 = vmatprep.mubr.f32.mxu0 0.0
        %1611 = vmatmul.mubr.f32.gmra.mxu0 %v1541
        %v1612 = vpop.f32.mrf.mxu0
        %v1613 = vadd.f32 0.0, %v1612
        %v1614 = vpop.f32.mrf.mxu0
        %1615 = vdwg.mxu0
        %v1616 = vsel %vm789, %v1613, -inf
        %1617 = vmax.xlane.f32.xlu0 %v1616
        %v1618 = vpop.xlane.xlu0 %1617
        %v1619 = vsub.f32 %v1613, %v1618
        %v1620 = vmul.f32 %v1619, 1.442695
        %v1621 = vpow.pop %v1620
        %v1622 = vsel %vm789, %v1621, 0.0
        %1623 = vadd.xlane.f32.xlu0 %v1622
        %v1624 = vpop.xlane.xlu0 %1623
        %v1625 = vrcp.pop %v1624
        %v1626 = vmul.f32 %v1621, %v1625
        %s1627 = scalar_lea.vmem [#allocation3], %s1537
        %v1628 = vld [vmem:[%s1627] sm:$0xff]
        %v1630 = vsel %vm789, %v1626, 0
        %1632 = vmatprep.subr.mxu0 0.0
        %1633 = vmatpush1.msra.mxu0 0.0
        %1634 = vmatprep.subr.mxu0 0.0
        %1635 = vmatpush1.msra.mxu0 0.0
        %1636 = vmatprep.subr.mxu0 0.0
        %1637 = vmatpush1.msra.mxu0 0.0
        %1638 = vmatprep.subr.mxu0 0.0
        %1639 = vmatpush1.msra.mxu0 0.0
        %1640 = vmatprep.subr.mxu0 0.0
        %1641 = vmatpush1.msra.mxu0 0.0
        %1642 = vmatprep.subr.mxu0 0.0
        %1643 = vmatpush1.msra.mxu0 0.0
        %1644 = vmatprep.subr.mxu0 0.0
        %1645 = vmatpush1.msra.mxu0 0.0
        %1646 = vmatprep.subr.mxu0 0.0
        %1647 = vmatpush1.msra.mxu0 0.0
        %1648 = vmatprep.subr.mxu0 0.0
        %1649 = vmatpush1.msra.mxu0 0.0
        %1650 = vmatprep.subr.mxu0 0.0
        %1651 = vmatpush1.msra.mxu0 0.0
        %1652 = vmatprep.subr.mxu0 0.0
        %1653 = vmatpush1.msra.mxu0 0.0
        %1654 = vmatprep.subr.mxu0 0.0
        %1655 = vmatpush1.msra.mxu0 0.0
        %1656 = vmatprep.subr.mxu0 0.0
        %1657 = vmatpush1.msra.mxu0 0.0
        %1658 = vmatprep.subr.mxu0 0.0
        %1659 = vmatpush1.msra.mxu0 0.0
        %1660 = vmatprep.subr.mxu0 0.0
        %1661 = vmatpush1.msra.mxu0 0.0
        %1662 = vmatprep.subr.mxu0 0.0
        %1663 = vmatpush1.msra.mxu0 %v1628
        %1664 = vmatprep.subr.mxu0 0.0
        %1665 = vmatpush2.msra.mxu0 0.0
        %1666 = vmatprep.subr.mxu0 0.0
        %1667 = vmatpush2.msra.mxu0 0.0
        %1668 = vmatprep.subr.mxu0 0.0
        %1669 = vmatpush2.msra.mxu0 0.0
        %1670 = vmatprep.subr.mxu0 0.0
        %1671 = vmatpush2.msra.mxu0 0.0
        %1672 = vmatprep.subr.mxu0 0.0
        %1673 = vmatpush2.msra.mxu0 0.0
        %1674 = vmatprep.subr.mxu0 0.0
        %1675 = vmatpush2.msra.mxu0 0.0
        %1676 = vmatprep.subr.mxu0 0.0
        %1677 = vmatpush2.msra.mxu0 0.0
        %1678 = vmatprep.subr.mxu0 0.0
        %1679 = vmatpush2.msra.mxu0 0.0
        %1680 = vmatprep.subr.mxu0 0.0
        %1681 = vmatpush2.msra.mxu0 0.0
        %1682 = vmatprep.subr.mxu0 0.0
        %1683 = vmatpush2.msra.mxu0 0.0
        %1684 = vmatprep.subr.mxu0 0.0
        %1685 = vmatpush2.msra.mxu0 0.0
        %1686 = vmatprep.subr.mxu0 0.0
        %1687 = vmatpush2.msra.mxu0 0.0
        %1688 = vmatprep.subr.mxu0 0.0
        %1689 = vmatpush2.msra.mxu0 0.0
        %1690 = vmatprep.subr.mxu0 0.0
        %1691 = vmatpush2.msra.mxu0 0.0
        %1692 = vmatprep.subr.mxu0 0.0
        %1693 = vmatpush2.msra.mxu0 0.0
        %1694 = vmatprep.subr.mxu0 0.0
        %1695 = vmatpush2.msra.mxu0 0.0
        %1696 = vmatprep.mubr.f32.mxu0 0.0
        %1697 = vmatmul.mubr.f32.gmra.mxu0 %v1630
        %v1698 = vpop.f32.mrf.mxu0
        %v1699 = vadd.f32 0.0, %v1698
        %v1700 = vpop.f32.mrf.mxu0
        %1701 = vdwg.mxu0
        %1703 = vrot.lane.b32.xlu0 %v1199, 8
        %v1704 = vpop.permute.xlu0 %1703
        %1707 = vrot.lane.b32.xlu0 %v1449, 16
        %v1708 = vpop.permute.xlu0 %1707
        %1711 = vrot.lane.b32.xlu0 %v1699, 24
        %v1712 = vpop.permute.xlu0 %1711
        %v1714 = vsel %vm789, %v949, %v1704
        %vm1715 = vcmask 130048
        %v1716 = vsel %vm1715, %v1714, %v1708
        %vm1717 = vcmask 195584
        %v1718 = vsel %vm1717, %v1716, %v1712
        %v1719 = vld [vmem:[#allocation4] sm:$0xff]
        %s1720 = smul.u32 %s28, 32
        %s1721 = scalar_lea.vmem %s5, %s1720
        %v1722 = vld [vmem:[%s1721] sm:$0xff]
        %v1723 = vld [vmem:[%s1721 + $0x8] sm:$0xff]
        %v1724 = vld [vmem:[%s1721 + $0x10] sm:$0xff]
        %v1725 = vld [vmem:[%s1721 + $0x18] sm:$0xff]
        %v1727 = vsel %vm712, %v1718, 0
        %1729 = vmatprep.subr.mxu0 0.0
        %1730 = vmatpush1.msra.mxu0 0.0
        %1731 = vmatprep.subr.mxu0 0.0
        %1732 = vmatpush1.msra.mxu0 0.0
        %1733 = vmatprep.subr.mxu0 0.0
        %1734 = vmatpush1.msra.mxu0 0.0
        %1735 = vmatprep.subr.mxu0 0.0
        %1736 = vmatpush1.msra.mxu0 0.0
        %1737 = vmatprep.subr.mxu0 0.0
        %1738 = vmatpush1.msra.mxu0 0.0
        %1739 = vmatprep.subr.mxu0 0.0
        %1740 = vmatpush1.msra.mxu0 0.0
        %1741 = vmatprep.subr.mxu0 0.0
        %1742 = vmatpush1.msra.mxu0 0.0
        %1743 = vmatprep.subr.mxu0 0.0
        %1744 = vmatpush1.msra.mxu0 0.0
        %1745 = vmatprep.subr.mxu0 0.0
        %1746 = vmatpush1.msra.mxu0 0.0
        %1747 = vmatprep.subr.mxu0 0.0
        %1748 = vmatpush1.msra.mxu0 0.0
        %1749 = vmatprep.subr.mxu0 0.0
        %1750 = vmatpush1.msra.mxu0 0.0
        %1751 = vmatprep.subr.mxu0 0.0
        %1752 = vmatpush1.msra.mxu0 0.0
        %1753 = vmatprep.subr.mxu0 0.0
        %1754 = vmatpush1.msra.mxu0 %v1725
        %1755 = vmatprep.subr.mxu0 0.0
        %1756 = vmatpush1.msra.mxu0 %v1724
        %1757 = vmatprep.subr.mxu0 0.0
        %1758 = vmatpush1.msra.mxu0 %v1723
        %1759 = vmatprep.subr.mxu0 0.0
        %1760 = vmatpush1.msra.mxu0 %v1722
        %1761 = vmatprep.subr.mxu0 0.0
        %1762 = vmatpush2.msra.mxu0 0.0
        %1763 = vmatprep.subr.mxu0 0.0
        %1764 = vmatpush2.msra.mxu0 0.0
        %1765 = vmatprep.subr.mxu0 0.0
        %1766 = vmatpush2.msra.mxu0 0.0
        %1767 = vmatprep.subr.mxu0 0.0
        %1768 = vmatpush2.msra.mxu0 0.0
        %1769 = vmatprep.subr.mxu0 0.0
        %1770 = vmatpush2.msra.mxu0 0.0
        %1771 = vmatprep.subr.mxu0 0.0
        %1772 = vmatpush2.msra.mxu0 0.0
        %1773 = vmatprep.subr.mxu0 0.0
        %1774 = vmatpush2.msra.mxu0 0.0
        %1775 = vmatprep.subr.mxu0 0.0
        %1776 = vmatpush2.msra.mxu0 0.0
        %1777 = vmatprep.subr.mxu0 0.0
        %1778 = vmatpush2.msra.mxu0 0.0
        %1779 = vmatprep.subr.mxu0 0.0
        %1780 = vmatpush2.msra.mxu0 0.0
        %1781 = vmatprep.subr.mxu0 0.0
        %1782 = vmatpush2.msra.mxu0 0.0
        %1783 = vmatprep.subr.mxu0 0.0
        %1784 = vmatpush2.msra.mxu0 0.0
        %1785 = vmatprep.subr.mxu0 0.0
        %1786 = vmatpush2.msra.mxu0 0.0
        %1787 = vmatprep.subr.mxu0 0.0
        %1788 = vmatpush2.msra.mxu0 0.0
        %1789 = vmatprep.subr.mxu0 0.0
        %1790 = vmatpush2.msra.mxu0 0.0
        %1791 = vmatprep.subr.mxu0 0.0
        %1792 = vmatpush2.msra.mxu0 0.0
        %1793 = vmatprep.mubr.f32.mxu0 0.0
        %1794 = vmatmul.mubr.f32.gmra.mxu0 %v1727
        %v1795 = vpop.f32.mrf.mxu0
        %v1796 = vadd.f32 0.0, %v1795
        %v1797 = vpop.f32.mrf.mxu0
        %1798 = vdwg.mxu0
        %v1799 = vadd.f32 %v1719, %v1796
        %1800 = vst.msk [vmem:[#allocation4] sm:$0xff] %vm712, %v1799
        // Predicated region
        $region57: #{tpu_custom_call.1} parent=47 // pred_check
          %p1801 = pneg %p295
        $region58: #{tpu_custom_call.1} parent=47 // pred_check_branch
          %1803 = sbr.rel (%p1801) target = $region60
        $region59: #{tpu_custom_call.1} parent=47 // pred_region
          %v1804 = vld [vmem:[#allocation4] sm:$0xff]
          %1805 = vst.msk [vmem:[%s290] sm:$0xff] %vm712, %v1804
        $region60: #{tpu_custom_call.1} parent=47 // pred_fallthru
          _
        %s1806 = sand.u32 %s202, 1
        %s1807 = scalar_lea.sflag [#allocation6], %s1806
        %s1808 = sand.u32 %s202, 1
        %s1809 = smul.addr %s1808, 8
        %s1810 = scalar_lea.vmem [#allocation5], %s1809
        // Predicated region
        $region61: #{tpu_custom_call.1} parent=47 // pred_check
          %p1811 = pneg %p212
        $region62: #{tpu_custom_call.1} parent=47 // pred_check_branch
          %1813 = sbr.rel (%p1811) target = $region64
        $region63: #{tpu_custom_call.1} parent=47 // pred_region
          %s1815 = ssub.s32 128, 128
          %1816 = vsyncadd %s1807, %s1815
          %s1817 = sadd.s32 %s27, %s26
          %s1818 = smul.addr %s1817, 128
          %s1819 = scalar_lea.hbm %s7, %s1818
          %s1821 = sshll.u32 %s1810, 4
          %s1822 = int_to_ptr.vmem [resolvable:$true] %s1821
          %1824 = dma.vmem_to_hbm [thread:$0]  %s1822, 128, %s1819, %s1807
        $region64: #{tpu_custom_call.1} parent=47 // pred_fallthru
          _
      $region48: #{tpu_custom_call.1} parent=5 // pred_fallthru
        _
      %p1825 = scmp.le.s32.totalorder 2, %s16
      // Predicated region
      $region65: #{tpu_custom_call.1} parent=5 // pred_check
        %p1826 = pneg %p1825
      $region66: #{tpu_custom_call.1} parent=5 // pred_check_branch
        %1828 = sbr.rel (%p1826) target = $region68
      $region67: #{tpu_custom_call.1} parent=5 // pred_region
        %s1829 = ssub.s32 %s16, 2
        // Predicated region
        $region69: #{tpu_custom_call.1} parent=67 // pred_check
          %p1830 = pneg %p218
        $region70: #{tpu_custom_call.1} parent=67 // pred_check_branch
          %1832 = sbr.rel (%p1830) target = $region72
        $region71: #{tpu_custom_call.1} parent=67 // pred_region
          %s1833 = sand.u32 %s203, 1
          %s1834 = scalar_lea.sflag [#allocation6], %s1833
          %s1835 = sand.u32 %s203, 1
          %s1836 = smul.addr %s1835, 8
          %s1837 = scalar_lea.vmem [#allocation5], %s1836
          %1838 = dma.done %s1834, 128
        $region72: #{tpu_custom_call.1} parent=67 // pred_fallthru
          _
      $region68: #{tpu_custom_call.1} parent=5 // pred_fallthru
        _
    $region6: #{tpu_custom_call.1} parent=1 // loop_footer
      %s20 = sadd.s32 1, %s16
    $region7: #{tpu_custom_call.1} parent=1 // loop_footer_branch
      %15 = sbr.rel target = $region3
    $region8: #{tpu_custom_call.1} parent=1 // loop_exit
      _
    %1839 = vsyncpa [#allocation6], 1
    %s1840 = scalar_lea.sflag [#allocation6], 1
    %1841 = vsyncpa %s1840, 1

</llo_original>
